<compile_context>
chip_gen: v5e
topology: v5e:2x2
jax: 0.10.0
libtpu: 0.0.40
codegen_flags: <defaults>
</compile_context>

<pallas_src>
import jax
import jax.numpy as jnp
from jax import lax
from jax.experimental import pallas as pl
from jax.experimental.pallas import tpu as pltpu


def _make_sdpa_kernel(tb, d, matmul_dtype):
    def head_out(q_ref, k_ref, b):
        qm = q_ref[b].astype(matmul_dtype)          # (S, D)
        km = k_ref[b].astype(matmul_dtype)          # (S, D)

        # scores = q @ k^T  (MXU, f32 accumulation), shape (S, S)
        s = lax.dot_general(
            qm, km, (((1,), (1,)), ((), ())),
            preferred_element_type=jnp.float32)

        # numerically stable softmax over the last axis; normalization is
        # hoisted past the second matmul (scale (S, D) instead of (S, S)).
        m = jnp.max(s, axis=-1, keepdims=True)
        e = jnp.exp(s - m)
        l = jnp.sum(e, axis=-1, keepdims=True)

        # unnormalized output = e @ k  (x3 plays V as well), shape (S, D)
        o = lax.dot_general(
            e.astype(matmul_dtype), km, (((1,), (0,)), ((), ())),
            preferred_element_type=jnp.float32)
        return o * (1.0 / l)                         # exact normalization

    def kernel(q_ref, k_ref, o_ref):
        # q_ref, k_ref: (TB, S, D) VMEM tiles; o_ref: (1, S, TB*D) lane-dense slab.
        for p in range(tb // 2):
            b0 = 2 * p
            pair = jnp.concatenate(
                [head_out(q_ref, k_ref, b0), head_out(q_ref, k_ref, b0 + 1)],
                axis=-1)                             # (S, 2*D) -> 128-lane store
            o_ref[0, :, b0 * d:(b0 + 2) * d] = pair.astype(o_ref.dtype)
        if tb % 2 == 1:
            b = tb - 1
            o_ref[0, :, b * d:(b + 1) * d] = head_out(q_ref, k_ref, b).astype(
                o_ref.dtype)

    return kernel


def _default_grid_steps():
    # v7x has 2 TensorCores per chip -> split the head batch across both via a
    # "parallel" grid axis.  v5e/v6e are single-TC: one step, no pad/slice.
    try:
        kind = jax.devices()[0].device_kind.lower()
    except Exception:  # pragma: no cover - defensive (interpret / CPU emulation)
        kind = ""
    return 2 if "v7" in kind else 1


def attention_no_mask(x2, x3, *, matmul_dtype=None, grid_steps=None):
    """Pallas TPU forward of Model.forward with attention_mask=None.

    x2, x3: (B, H, S, D) arrays of the same shape/dtype. Returns (B, H, S, D).
    matmul_dtype: MXU operand dtype; defaults to bf16 for f32 inputs (fast path),
    pass jnp.float32 for the exact path. Accumulation is always f32.
    """
    assert x2.shape == x3.shape
    B, H, S, D = x2.shape
    if matmul_dtype is None:
        matmul_dtype = jnp.bfloat16 if x2.dtype == jnp.float32 else x2.dtype

    BH = B * H
    q = x2.reshape(BH, S, D)
    k = x3.reshape(BH, S, D)

    if grid_steps is None:
        grid_steps = _default_grid_steps()
    grid_steps = max(1, min(int(grid_steps), BH))

    TB = pl.cdiv(BH, grid_steps)          # heads per grid step
    num_steps = pl.cdiv(BH, TB)
    BH_pad = num_steps * TB
    if BH_pad != BH:
        pad = ((0, BH_pad - BH), (0, 0), (0, 0))
        q = jnp.pad(q, pad)               # zero heads -> uniform softmax @ 0 = 0
        k = jnp.pad(k, pad)

    itemsize = jnp.dtype(x2.dtype).itemsize
    cost = pl.CostEstimate(
        flops=4 * BH_pad * S * S * D,      # two (S,S,D) matmuls per head
        transcendentals=BH_pad * S * S,    # softmax exp
        bytes_accessed=3 * BH_pad * S * D * itemsize,
    )

    out = pl.pallas_call(
        _make_sdpa_kernel(TB, D, matmul_dtype),
        out_shape=jax.ShapeDtypeStruct((num_steps, S, TB * D), x2.dtype),
        grid_spec=pl.GridSpec(
            grid=(num_steps,),
            in_specs=[
                pl.BlockSpec((TB, S, D), lambda i: (i, 0, 0)),
                pl.BlockSpec((TB, S, D), lambda i: (i, 0, 0)),
            ],
            out_specs=pl.BlockSpec((1, S, TB * D), lambda i: (i, 0, 0)),
        ),
        compiler_params=pltpu.CompilerParams(
            dimension_semantics=("parallel",)),
        cost_estimate=cost,
    )(q, k)

    # Undo the lane-dense head packing: (steps, S, TB*D) -> (BH_pad, S, D).
    out = out.reshape(num_steps, S, TB, D).transpose(0, 2, 1, 3)
    out = out.reshape(BH_pad, S, D)
    if BH_pad != BH:
        out = out[:BH]
    return out.reshape(B, H, S, D)


def _reference(x2, x3):
    s = jnp.einsum('bhsd,bhtd->bhst', x2, x3)
    p = jax.nn.softmax(s, axis=-1)
    return jnp.einsum('bhst,bhtd->bhsd', p, x3)


if __name__ == "__main__":
    key = jax.random.PRNGKey(0)
    k1, k2 = jax.random.split(key)
    # Same shapes as the torch module's inputs: (5, 1, 64, 64).
    B, H, S, D = 5, 1, 64, 64
    x2 = jax.random.normal(k1, (B, H, S, D), dtype=jnp.float32)
    x3 = jax.random.normal(k2, (B, H, S, D), dtype=jnp.float32)

    ref = _reference(x2, x3)

    # Exact path: f32 MXU operands + exact softmax normalization.
    out_exact = attention_no_mask(x2, x3, matmul_dtype=jnp.float32)
    jax.block_until_ready(out_exact)
    assert out_exact.shape == (B, H, S, D)
    assert jnp.allclose(out_exact, ref, atol=2e-3, rtol=2e-3), "exact path mismatch"

    # Default fast path: bf16 MXU operands, f32 accumulation.
    out_fast = attention_no_mask(x2, x3)
    jax.block_until_ready(out_fast)
    assert bool(jnp.isfinite(out_fast).all()), "non-finite values in fast path"
    diff = jnp.abs(out_fast - ref)
    assert float(jnp.mean(diff)) < 5e-2 and float(jnp.max(diff)) < 1.0, \
        "bf16 fast path mismatch"

    # Also exercise the two-step (v7x-style) grid with padded head batch.
    out_two = attention_no_mask(x2, x3, matmul_dtype=jnp.float32, grid_steps=2)
    jax.block_until_ready(out_two)
    assert jnp.allclose(out_two, ref, atol=2e-3, rtol=2e-3), "2-step grid mismatch"

    print("KERNEL_OK")
</pallas_src>

<mosaic_0001>
module attributes {stable_mosaic.version = 11 : i64} {
  func.func @kernel(%arg0: i32, %arg1: memref<5x64x64xf32, #tpu.memory_space<vmem>>, %arg2: memref<5x64x64xf32, #tpu.memory_space<vmem>>, %arg3: memref<1x64x320xf32, #tpu.memory_space<vmem>>) attributes {dimension_semantics = [#tpu.dimension_semantics<parallel>], iteration_bounds = array<i64: 1>, scalar_prefetch = 0 : i64, scratch_operands = 0 : i64, tpu.core_type = #tpu.core_type<tc>, window_params = [{transform_indices = @transform_0, window_bounds = array<i64: 5, 64, 64>}, {transform_indices = @transform_1, window_bounds = array<i64: 5, 64, 64>}, {transform_indices = @transform_2, window_bounds = array<i64: 1, 64, 320>}]} {
    %c0 = arith.constant 0 : index
    %c0_0 = arith.constant 0 : index
    %c0_1 = arith.constant 0 : index
    %0 = vector.load %arg1[%c0, %c0_0, %c0_1] : memref<5x64x64xf32, #tpu.memory_space<vmem>>, vector<1x64x64xf32>
    %1 = vector.shape_cast %0 : vector<1x64x64xf32> to vector<64x64xf32>
    %c0_2 = arith.constant 0 : index
    %c0_3 = arith.constant 0 : index
    %c0_4 = arith.constant 0 : index
    %2 = vector.load %arg2[%c0_2, %c0_3, %c0_4] : memref<5x64x64xf32, #tpu.memory_space<vmem>>, vector<1x64x64xf32>
    %3 = vector.shape_cast %2 : vector<1x64x64xf32> to vector<64x64xf32>
    %cst = arith.constant dense<0.000000e+00> : vector<64x64xf32>
    %4 = tpu.matmul %1, %3, %cst {dimension_numbers = #tpu.dot_dimension_numbers<[1], [1], [0], [0], [0, 0, 1, 0], [], []>} : vector<64x64xf32>, vector<64x64xf32>, vector<64x64xf32> -> vector<64x64xf32>
    %cst_5 = arith.constant dense<0xFF800000> : vector<64xf32>
    %5 = vector.multi_reduction <maximumf>, %4, %cst_5 [1] : vector<64x64xf32> to vector<64xf32>
    %6 = vector.shape_cast %5 : vector<64xf32> to vector<64x1xf32>
    %7 = vector.broadcast %6 : vector<64x1xf32> to vector<64x64xf32>
    %8 = arith.subf %4, %7 : vector<64x64xf32>
    %9 = math.exp %8 : vector<64x64xf32>
    %cst_6 = arith.constant dense<0.000000e+00> : vector<64xf32>
    %10 = vector.multi_reduction <add>, %9, %cst_6 [1] : vector<64x64xf32> to vector<64xf32>
    %11 = vector.shape_cast %10 : vector<64xf32> to vector<64x1xf32>
    %cst_7 = arith.constant dense<0.000000e+00> : vector<64x64xf32>
    %12 = tpu.matmul %9, %3, %cst_7 {dimension_numbers = #tpu.dot_dimension_numbers<[1], [0], [0], [1], [0, 0, 1, 1], [], []>} : vector<64x64xf32>, vector<64x64xf32>, vector<64x64xf32> -> vector<64x64xf32>
    %cst_8 = arith.constant 1.000000e+00 : f32
    %13 = vector.broadcast %cst_8 : f32 to vector<64x1xf32>
    %14 = arith.divf %13, %11 : vector<64x1xf32>
    %15 = vector.broadcast %14 : vector<64x1xf32> to vector<64x64xf32>
    %16 = arith.mulf %12, %15 : vector<64x64xf32>
    %c1 = arith.constant 1 : index
    %c0_9 = arith.constant 0 : index
    %c0_10 = arith.constant 0 : index
    %17 = vector.load %arg1[%c1, %c0_9, %c0_10] : memref<5x64x64xf32, #tpu.memory_space<vmem>>, vector<1x64x64xf32>
    %18 = vector.shape_cast %17 : vector<1x64x64xf32> to vector<64x64xf32>
    %c1_11 = arith.constant 1 : index
    %c0_12 = arith.constant 0 : index
    %c0_13 = arith.constant 0 : index
    %19 = vector.load %arg2[%c1_11, %c0_12, %c0_13] : memref<5x64x64xf32, #tpu.memory_space<vmem>>, vector<1x64x64xf32>
    %20 = vector.shape_cast %19 : vector<1x64x64xf32> to vector<64x64xf32>
    %cst_14 = arith.constant dense<0.000000e+00> : vector<64x64xf32>
    %21 = tpu.matmul %18, %20, %cst_14 {dimension_numbers = #tpu.dot_dimension_numbers<[1], [1], [0], [0], [0, 0, 1, 0], [], []>} : vector<64x64xf32>, vector<64x64xf32>, vector<64x64xf32> -> vector<64x64xf32>
    %cst_15 = arith.constant dense<0xFF800000> : vector<64xf32>
    %22 = vector.multi_reduction <maximumf>, %21, %cst_15 [1] : vector<64x64xf32> to vector<64xf32>
    %23 = vector.shape_cast %22 : vector<64xf32> to vector<64x1xf32>
    %24 = vector.broadcast %23 : vector<64x1xf32> to vector<64x64xf32>
    %25 = arith.subf %21, %24 : vector<64x64xf32>
    %26 = math.exp %25 : vector<64x64xf32>
    %cst_16 = arith.constant dense<0.000000e+00> : vector<64xf32>
    %27 = vector.multi_reduction <add>, %26, %cst_16 [1] : vector<64x64xf32> to vector<64xf32>
    %28 = vector.shape_cast %27 : vector<64xf32> to vector<64x1xf32>
    %cst_17 = arith.constant dense<0.000000e+00> : vector<64x64xf32>
    %29 = tpu.matmul %26, %20, %cst_17 {dimension_numbers = #tpu.dot_dimension_numbers<[1], [0], [0], [1], [0, 0, 1, 1], [], []>} : vector<64x64xf32>, vector<64x64xf32>, vector<64x64xf32> -> vector<64x64xf32>
    %cst_18 = arith.constant 1.000000e+00 : f32
    %30 = vector.broadcast %cst_18 : f32 to vector<64x1xf32>
    %31 = arith.divf %30, %28 : vector<64x1xf32>
    %32 = vector.broadcast %31 : vector<64x1xf32> to vector<64x64xf32>
    %33 = arith.mulf %29, %32 : vector<64x64xf32>
    %34 = tpu.concatenate %16, %33 in 1 : vector<64x64xf32>, vector<64x64xf32> -> vector<64x128xf32>
    %c0_19 = arith.constant 0 : index
    %c0_20 = arith.constant 0 : index
    %c0_21 = arith.constant 0 : index
    %35 = vector.load %arg3[%c0_19, %c0_20, %c0_21] : memref<1x64x320xf32, #tpu.memory_space<vmem>>, vector<1x64x128xf32>
    %36 = vector.shape_cast %35 : vector<1x64x128xf32> to vector<64x128xf32>
    %37 = vector.shape_cast %34 : vector<64x128xf32> to vector<1x64x128xf32>
    tpu.vector_store %arg3[%c0_19, %c0_20, %c0_21], %37 {strides = array<i32>} : memref<1x64x320xf32, #tpu.memory_space<vmem>>, vector<1x64x128xf32>,
    %c2 = arith.constant 2 : index
    %c0_22 = arith.constant 0 : index
    %c0_23 = arith.constant 0 : index
    %38 = vector.load %arg1[%c2, %c0_22, %c0_23] : memref<5x64x64xf32, #tpu.memory_space<vmem>>, vector<1x64x64xf32>
    %39 = vector.shape_cast %38 : vector<1x64x64xf32> to vector<64x64xf32>
    %c2_24 = arith.constant 2 : index
    %c0_25 = arith.constant 0 : index
    %c0_26 = arith.constant 0 : index
    %40 = vector.load %arg2[%c2_24, %c0_25, %c0_26] : memref<5x64x64xf32, #tpu.memory_space<vmem>>, vector<1x64x64xf32>
    %41 = vector.shape_cast %40 : vector<1x64x64xf32> to vector<64x64xf32>
    %cst_27 = arith.constant dense<0.000000e+00> : vector<64x64xf32>
    %42 = tpu.matmul %39, %41, %cst_27 {dimension_numbers = #tpu.dot_dimension_numbers<[1], [1], [0], [0], [0, 0, 1, 0], [], []>} : vector<64x64xf32>, vector<64x64xf32>, vector<64x64xf32> -> vector<64x64xf32>
    %cst_28 = arith.constant dense<0xFF800000> : vector<64xf32>
    %43 = vector.multi_reduction <maximumf>, %42, %cst_28 [1] : vector<64x64xf32> to vector<64xf32>
    %44 = vector.shape_cast %43 : vector<64xf32> to vector<64x1xf32>
    %45 = vector.broadcast %44 : vector<64x1xf32> to vector<64x64xf32>
    %46 = arith.subf %42, %45 : vector<64x64xf32>
    %47 = math.exp %46 : vector<64x64xf32>
    %cst_29 = arith.constant dense<0.000000e+00> : vector<64xf32>
    %48 = vector.multi_reduction <add>, %47, %cst_29 [1] : vector<64x64xf32> to vector<64xf32>
    %49 = vector.shape_cast %48 : vector<64xf32> to vector<64x1xf32>
    %cst_30 = arith.constant dense<0.000000e+00> : vector<64x64xf32>
    %50 = tpu.matmul %47, %41, %cst_30 {dimension_numbers = #tpu.dot_dimension_numbers<[1], [0], [0], [1], [0, 0, 1, 1], [], []>} : vector<64x64xf32>, vector<64x64xf32>, vector<64x64xf32> -> vector<64x64xf32>
    %cst_31 = arith.constant 1.000000e+00 : f32
    %51 = vector.broadcast %cst_31 : f32 to vector<64x1xf32>
    %52 = arith.divf %51, %49 : vector<64x1xf32>
    %53 = vector.broadcast %52 : vector<64x1xf32> to vector<64x64xf32>
    %54 = arith.mulf %50, %53 : vector<64x64xf32>
    %c3 = arith.constant 3 : index
    %c0_32 = arith.constant 0 : index
    %c0_33 = arith.constant 0 : index
    %55 = vector.load %arg1[%c3, %c0_32, %c0_33] : memref<5x64x64xf32, #tpu.memory_space<vmem>>, vector<1x64x64xf32>
    %56 = vector.shape_cast %55 : vector<1x64x64xf32> to vector<64x64xf32>
    %c3_34 = arith.constant 3 : index
    %c0_35 = arith.constant 0 : index
    %c0_36 = arith.constant 0 : index
    %57 = vector.load %arg2[%c3_34, %c0_35, %c0_36] : memref<5x64x64xf32, #tpu.memory_space<vmem>>, vector<1x64x64xf32>
    %58 = vector.shape_cast %57 : vector<1x64x64xf32> to vector<64x64xf32>
    %cst_37 = arith.constant dense<0.000000e+00> : vector<64x64xf32>
    %59 = tpu.matmul %56, %58, %cst_37 {dimension_numbers = #tpu.dot_dimension_numbers<[1], [1], [0], [0], [0, 0, 1, 0], [], []>} : vector<64x64xf32>, vector<64x64xf32>, vector<64x64xf32> -> vector<64x64xf32>
    %cst_38 = arith.constant dense<0xFF800000> : vector<64xf32>
    %60 = vector.multi_reduction <maximumf>, %59, %cst_38 [1] : vector<64x64xf32> to vector<64xf32>
    %61 = vector.shape_cast %60 : vector<64xf32> to vector<64x1xf32>
    %62 = vector.broadcast %61 : vector<64x1xf32> to vector<64x64xf32>
    %63 = arith.subf %59, %62 : vector<64x64xf32>
    %64 = math.exp %63 : vector<64x64xf32>
    %cst_39 = arith.constant dense<0.000000e+00> : vector<64xf32>
    %65 = vector.multi_reduction <add>, %64, %cst_39 [1] : vector<64x64xf32> to vector<64xf32>
    %66 = vector.shape_cast %65 : vector<64xf32> to vector<64x1xf32>
    %cst_40 = arith.constant dense<0.000000e+00> : vector<64x64xf32>
    %67 = tpu.matmul %64, %58, %cst_40 {dimension_numbers = #tpu.dot_dimension_numbers<[1], [0], [0], [1], [0, 0, 1, 1], [], []>} : vector<64x64xf32>, vector<64x64xf32>, vector<64x64xf32> -> vector<64x64xf32>
    %cst_41 = arith.constant 1.000000e+00 : f32
    %68 = vector.broadcast %cst_41 : f32 to vector<64x1xf32>
    %69 = arith.divf %68, %66 : vector<64x1xf32>
    %70 = vector.broadcast %69 : vector<64x1xf32> to vector<64x64xf32>
    %71 = arith.mulf %67, %70 : vector<64x64xf32>
    %72 = tpu.concatenate %54, %71 in 1 : vector<64x64xf32>, vector<64x64xf32> -> vector<64x128xf32>
    %c0_42 = arith.constant 0 : index
    %c0_43 = arith.constant 0 : index
    %c128 = arith.constant 128 : index
    %73 = vector.load %arg3[%c0_42, %c0_43, %c128] : memref<1x64x320xf32, #tpu.memory_space<vmem>>, vector<1x64x128xf32>
    %74 = vector.shape_cast %73 : vector<1x64x128xf32> to vector<64x128xf32>
    %75 = vector.shape_cast %72 : vector<64x128xf32> to vector<1x64x128xf32>
    tpu.vector_store %arg3[%c0_42, %c0_43, %c128], %75 {strides = array<i32>} : memref<1x64x320xf32, #tpu.memory_space<vmem>>, vector<1x64x128xf32>,
    %c4 = arith.constant 4 : index
    %c0_44 = arith.constant 0 : index
    %c0_45 = arith.constant 0 : index
    %76 = vector.load %arg1[%c4, %c0_44, %c0_45] : memref<5x64x64xf32, #tpu.memory_space<vmem>>, vector<1x64x64xf32>
    %77 = vector.shape_cast %76 : vector<1x64x64xf32> to vector<64x64xf32>
    %c4_46 = arith.constant 4 : index
    %c0_47 = arith.constant 0 : index
    %c0_48 = arith.constant 0 : index
    %78 = vector.load %arg2[%c4_46, %c0_47, %c0_48] : memref<5x64x64xf32, #tpu.memory_space<vmem>>, vector<1x64x64xf32>
    %79 = vector.shape_cast %78 : vector<1x64x64xf32> to vector<64x64xf32>
    %cst_49 = arith.constant dense<0.000000e+00> : vector<64x64xf32>
    %80 = tpu.matmul %77, %79, %cst_49 {dimension_numbers = #tpu.dot_dimension_numbers<[1], [1], [0], [0], [0, 0, 1, 0], [], []>} : vector<64x64xf32>, vector<64x64xf32>, vector<64x64xf32> -> vector<64x64xf32>
    %cst_50 = arith.constant dense<0xFF800000> : vector<64xf32>
    %81 = vector.multi_reduction <maximumf>, %80, %cst_50 [1] : vector<64x64xf32> to vector<64xf32>
    %82 = vector.shape_cast %81 : vector<64xf32> to vector<64x1xf32>
    %83 = vector.broadcast %82 : vector<64x1xf32> to vector<64x64xf32>
    %84 = arith.subf %80, %83 : vector<64x64xf32>
    %85 = math.exp %84 : vector<64x64xf32>
    %cst_51 = arith.constant dense<0.000000e+00> : vector<64xf32>
    %86 = vector.multi_reduction <add>, %85, %cst_51 [1] : vector<64x64xf32> to vector<64xf32>
    %87 = vector.shape_cast %86 : vector<64xf32> to vector<64x1xf32>
    %cst_52 = arith.constant dense<0.000000e+00> : vector<64x64xf32>
    %88 = tpu.matmul %85, %79, %cst_52 {dimension_numbers = #tpu.dot_dimension_numbers<[1], [0], [0], [1], [0, 0, 1, 1], [], []>} : vector<64x64xf32>, vector<64x64xf32>, vector<64x64xf32> -> vector<64x64xf32>
    %cst_53 = arith.constant 1.000000e+00 : f32
    %89 = vector.broadcast %cst_53 : f32 to vector<64x1xf32>
    %90 = arith.divf %89, %87 : vector<64x1xf32>
    %91 = vector.broadcast %90 : vector<64x1xf32> to vector<64x64xf32>
    %92 = arith.mulf %88, %91 : vector<64x64xf32>
    %c0_54 = arith.constant 0 : index
    %c0_55 = arith.constant 0 : index
    %c256 = arith.constant 256 : index
    %93 = vector.load %arg3[%c0_54, %c0_55, %c256] : memref<1x64x320xf32, #tpu.memory_space<vmem>>, vector<1x64x64xf32>
    %94 = vector.shape_cast %93 : vector<1x64x64xf32> to vector<64x64xf32>
    %95 = vector.shape_cast %92 : vector<64x64xf32> to vector<1x64x64xf32>
    tpu.vector_store %arg3[%c0_54, %c0_55, %c256], %95 {strides = array<i32>} : memref<1x64x320xf32, #tpu.memory_space<vmem>>, vector<1x64x64xf32>,
    return
  }
  func.func @transform_0(%arg0: i32) -> (i32, i32, i32) {
    %c0_i32 = arith.constant 0 : i32
    %c0_i32_0 = arith.constant 0 : i32
    %c0_i32_1 = arith.constant 0 : i32
    return %arg0, %c0_i32, %c0_i32_0 : i32, i32, i32
  }
  func.func @transform_1(%arg0: i32) -> (i32, i32, i32) {
    %c0_i32 = arith.constant 0 : i32
    %c0_i32_0 = arith.constant 0 : i32
    %c0_i32_1 = arith.constant 0 : i32
    return %arg0, %c0_i32, %c0_i32_0 : i32, i32, i32
  }
  func.func @transform_2(%arg0: i32) -> (i32, i32, i32) {
    %c0_i32 = arith.constant 0 : i32
    %c0_i32_0 = arith.constant 0 : i32
    %c0_i32_1 = arith.constant 0 : i32
    return %arg0, %c0_i32, %c0_i32_0 : i32, i32, i32
  }
}

</mosaic_0001>

<llo_original>
// kernel: tpu_custom_call.1
$region0: #{tpu_custom_call.1}
  #allocation0 [shape = 'u32[]', space=smem, size = 0x4, offset = 0x4, fixed_abs, tag = 'smem constant byte address 0x4 - core index']
  #allocation1 [shape = 'u32[72,128]{1,0:T(1,128)}', space=vmem, size = 0x9000, scoped, tag = 'internal scratch']
  %s0 = inlined_call_operand.hbm [shape: f32[5,64,64], index: 0, kind: input, shape index: {}]
  %s1 = inlined_call_operand.hbm [shape: f32[5,64,64], index: 1, kind: input, shape index: {}]
  %s2 = inlined_call_operand.hbm [shape: f32[1,64,320], index: 2, kind: output, shape index: {}]
  %s3 = sld [smem:[#allocation0]]
  $region26: #{tpu_custom_call.1} parent=0
    _
  %s5 = ssub.s32 1, %s3
  %s6 = scalar_select 0, %s5, %s3
  $region1: #{tpu_custom_call.1} parent=0
    #allocation2 [shape = 'u8[163840]{0}', space=vmem, size = 0x28000, scoped, tag = 'input window, operand 0, single buffered']
    #allocation3 [shape = 's32[1]{0}', space=sflag, size = 0x4, scoped, tag = 'scoped memory for tpu_custom_call.1']
    #allocation4 [shape = 's32[1]{0}', space=sflag, size = 0x4, scoped, tag = 'scoped memory for tpu_custom_call.1']
    #allocation5 [shape = 'u8[163840]{0}', space=vmem, size = 0x28000, scoped, tag = 'input window, operand 1, single buffered']
    #allocation6 [shape = 's32[1]{0}', space=sflag, size = 0x4, scoped, tag = 'scoped memory for tpu_custom_call.1']
    #allocation7 [shape = 'u8[98304]{0}', space=vmem, size = 0x18000, scoped, tag = 'output window, operand 0, single buffered']
    %7 = vsyncpa [#allocation3], 0
    %8 = vsyncpa [#allocation6], 0
    %9 = vsyncpa [#allocation4], 0
    // Predicated region
    $region2: #{tpu_custom_call.1} parent=1 // pred_check
      _
    $region3: #{tpu_custom_call.1} parent=1 // pred_check_branch
      %11 = sbr.rel (0) target = $region5
    $region4: #{tpu_custom_call.1} parent=1 // pred_region
      %13 = vsyncadd [#allocation3], 0
      %s14 = sshll.u32 %s0, 4
      %s15 = int_to_ptr.hbm [resolvable:$true] %s14
      %s16 = sshll.u32 [#allocation2], 4
      %s17 = int_to_ptr.vmem [resolvable:$true] %s16
      %22 = dma.hbm_to_vmem [thread:$0]  %s15, 5120, %s17, [#allocation3], 128, 128, 8
    $region5: #{tpu_custom_call.1} parent=1 // pred_fallthru
      _
    // Predicated region
    $region6: #{tpu_custom_call.1} parent=1 // pred_check
      _
    $region7: #{tpu_custom_call.1} parent=1 // pred_check_branch
      %24 = sbr.rel (0) target = $region9
    $region8: #{tpu_custom_call.1} parent=1 // pred_region
      %26 = vsyncadd [#allocation6], 0
      %s27 = sshll.u32 %s1, 4
      %s28 = int_to_ptr.hbm [resolvable:$true] %s27
      %s29 = sshll.u32 [#allocation5], 4
      %s30 = int_to_ptr.vmem [resolvable:$true] %s29
      %35 = dma.hbm_to_vmem [thread:$0]  %s28, 5120, %s30, [#allocation6], 128, 128, 8
    $region9: #{tpu_custom_call.1} parent=1 // pred_fallthru
      _
    // Predicated region
    $region10: #{tpu_custom_call.1} parent=1 // pred_check
      _
    $region11: #{tpu_custom_call.1} parent=1 // pred_check_branch
      %37 = sbr.rel (0) target = $region13
    $region12: #{tpu_custom_call.1} parent=1 // pred_region
      %39 = dma.done [#allocation3], 5120
    $region13: #{tpu_custom_call.1} parent=1 // pred_fallthru
      _
    // Predicated region
    $region14: #{tpu_custom_call.1} parent=1 // pred_check
      _
    $region15: #{tpu_custom_call.1} parent=1 // pred_check_branch
      %41 = sbr.rel (0) target = $region17
    $region16: #{tpu_custom_call.1} parent=1 // pred_region
      %43 = dma.done [#allocation6], 5120
    $region17: #{tpu_custom_call.1} parent=1 // pred_fallthru
      _
    %v44 = vld [vmem:[#allocation2] sm:$0xff]
    %v45 = vld [vmem:[#allocation2 + $0x8] sm:$0xff]
    %v46 = vld [vmem:[#allocation2 + $0x10] sm:$0xff]
    %v47 = vld [vmem:[#allocation2 + $0x18] sm:$0xff]
    %v48 = vld [vmem:[#allocation2 + $0x20] sm:$0xff]
    %v49 = vld [vmem:[#allocation2 + $0x28] sm:$0xff]
    %v50 = vld [vmem:[#allocation2 + $0x30] sm:$0xff]
    %v51 = vld [vmem:[#allocation2 + $0x38] sm:$0xff]
    %v52 = vld [vmem:[#allocation5] sm:$0xff]
    %v53 = vld [vmem:[#allocation5 + $0x8] sm:$0xff]
    %v54 = vld [vmem:[#allocation5 + $0x10] sm:$0xff]
    %v55 = vld [vmem:[#allocation5 + $0x18] sm:$0xff]
    %v56 = vld [vmem:[#allocation5 + $0x20] sm:$0xff]
    %v57 = vld [vmem:[#allocation5 + $0x28] sm:$0xff]
    %v58 = vld [vmem:[#allocation5 + $0x30] sm:$0xff]
    %v59 = vld [vmem:[#allocation5 + $0x38] sm:$0xff]
    %vm60 = vcmask 523264
    %v62 = vsel %vm60, %v44, 0
    %v65 = vsel %vm60, %v45, 0
    %v68 = vsel %vm60, %v46, 0
    %v71 = vsel %vm60, %v47, 0
    %v74 = vsel %vm60, %v48, 0
    %v77 = vsel %vm60, %v49, 0
    %v80 = vsel %vm60, %v50, 0
    %v83 = vsel %vm60, %v51, 0
    %v86 = vsel %vm60, %v52, 0
    %v89 = vsel %vm60, %v53, 0
    %v92 = vsel %vm60, %v54, 0
    %v95 = vsel %vm60, %v55, 0
    %v98 = vsel %vm60, %v56, 0
    %v101 = vsel %vm60, %v57, 0
    %v104 = vsel %vm60, %v58, 0
    %v107 = vsel %vm60, %v59, 0
    %109 = vmatpush.xpose.msra.mxu0 0.0
    %110 = vmatpush.xpose.msra.mxu0 0.0
    %111 = vmatpush.xpose.msra.mxu0 0.0
    %112 = vmatpush.xpose.msra.mxu0 0.0
    %113 = vmatpush.xpose.msra.mxu0 0.0
    %114 = vmatpush.xpose.msra.mxu0 0.0
    %115 = vmatpush.xpose.msra.mxu0 0.0
    %116 = vmatpush.xpose.msra.mxu0 0.0
    %117 = vmatpush.xpose.msra.mxu0 %v107
    %118 = vmatpush.xpose.msra.mxu0 %v104
    %119 = vmatpush.xpose.msra.mxu0 %v101
    %120 = vmatpush.xpose.msra.mxu0 %v98
    %121 = vmatpush.xpose.msra.mxu0 %v95
    %122 = vmatpush.xpose.msra.mxu0 %v92
    %123 = vmatpush.xpose.msra.mxu0 %v89
    %124 = vmatpush.xpose.msra.mxu0 %v86
    %125 = vmatmul.f32.gmra.mxu0 %v62
    %v126 = vpop.f32.mrf.mxu0
    %v127 = vadd.f32 0.0, %v126
    %128 = vmatmul.f32.gmra.mxu0 %v65
    %v129 = vpop.f32.mrf.mxu0
    %v130 = vadd.f32 0.0, %v129
    %131 = vmatmul.f32.gmra.mxu0 %v68
    %v132 = vpop.f32.mrf.mxu0
    %v133 = vadd.f32 0.0, %v132
    %134 = vmatmul.f32.gmra.mxu0 %v71
    %v135 = vpop.f32.mrf.mxu0
    %v136 = vadd.f32 0.0, %v135
    %137 = vmatmul.f32.gmra.mxu0 %v74
    %v138 = vpop.f32.mrf.mxu0
    %v139 = vadd.f32 0.0, %v138
    %140 = vmatmul.f32.gmra.mxu0 %v77
    %v141 = vpop.f32.mrf.mxu0
    %v142 = vadd.f32 0.0, %v141
    %143 = vmatmul.f32.gmra.mxu0 %v80
    %v144 = vpop.f32.mrf.mxu0
    %v145 = vadd.f32 0.0, %v144
    %146 = vmatmul.f32.gmra.mxu0 %v83
    %v147 = vpop.f32.mrf.mxu0
    %v148 = vadd.f32 0.0, %v147
    %149 = vdwg.mxu0
    %v150 = vsel %vm60, %v127, -inf
    %151 = vmax.xlane.f32.xlu0 %v150
    %v152 = vpop.xlane.xlu0 %151
    %v153 = vsel %vm60, %v130, -inf
    %154 = vmax.xlane.f32.xlu0 %v153
    %v155 = vpop.xlane.xlu0 %154
    %v156 = vsel %vm60, %v133, -inf
    %157 = vmax.xlane.f32.xlu0 %v156
    %v158 = vpop.xlane.xlu0 %157
    %v159 = vsel %vm60, %v136, -inf
    %160 = vmax.xlane.f32.xlu0 %v159
    %v161 = vpop.xlane.xlu0 %160
    %v162 = vsel %vm60, %v139, -inf
    %163 = vmax.xlane.f32.xlu0 %v162
    %v164 = vpop.xlane.xlu0 %163
    %v165 = vsel %vm60, %v142, -inf
    %166 = vmax.xlane.f32.xlu0 %v165
    %v167 = vpop.xlane.xlu0 %166
    %v168 = vsel %vm60, %v145, -inf
    %169 = vmax.xlane.f32.xlu0 %v168
    %v170 = vpop.xlane.xlu0 %169
    %v171 = vsel %vm60, %v148, -inf
    %172 = vmax.xlane.f32.xlu0 %v171
    %v173 = vpop.xlane.xlu0 %172
    %v174 = vsub.f32 %v127, %v152
    %v175 = vsub.f32 %v130, %v155
    %v176 = vsub.f32 %v133, %v158
    %v177 = vsub.f32 %v136, %v161
    %v178 = vsub.f32 %v139, %v164
    %v179 = vsub.f32 %v142, %v167
    %v180 = vsub.f32 %v145, %v170
    %v181 = vsub.f32 %v148, %v173
    %v182 = vmul.f32 %v174, 1.442695
    %v183 = vpow.pop %v182
    %v184 = vmul.f32 %v175, 1.442695
    %v185 = vpow.pop %v184
    %v186 = vmul.f32 %v176, 1.442695
    %v187 = vpow.pop %v186
    %v188 = vmul.f32 %v177, 1.442695
    %v189 = vpow.pop %v188
    %v190 = vmul.f32 %v178, 1.442695
    %v191 = vpow.pop %v190
    %v192 = vmul.f32 %v179, 1.442695
    %v193 = vpow.pop %v192
    %v194 = vmul.f32 %v180, 1.442695
    %v195 = vpow.pop %v194
    %v196 = vmul.f32 %v181, 1.442695
    %v197 = vpow.pop %v196
    %v198 = vsel %vm60, %v183, 0.0
    %199 = vadd.xlane.f32.xlu0 %v198
    %v200 = vpop.xlane.xlu0 %199
    %v201 = vsel %vm60, %v185, 0.0
    %202 = vadd.xlane.f32.xlu0 %v201
    %v203 = vpop.xlane.xlu0 %202
    %v204 = vsel %vm60, %v187, 0.0
    %205 = vadd.xlane.f32.xlu0 %v204
    %v206 = vpop.xlane.xlu0 %205
    %v207 = vsel %vm60, %v189, 0.0
    %208 = vadd.xlane.f32.xlu0 %v207
    %v209 = vpop.xlane.xlu0 %208
    %v210 = vsel %vm60, %v191, 0.0
    %211 = vadd.xlane.f32.xlu0 %v210
    %v212 = vpop.xlane.xlu0 %211
    %v213 = vsel %vm60, %v193, 0.0
    %214 = vadd.xlane.f32.xlu0 %v213
    %v215 = vpop.xlane.xlu0 %214
    %v216 = vsel %vm60, %v195, 0.0
    %217 = vadd.xlane.f32.xlu0 %v216
    %v218 = vpop.xlane.xlu0 %217
    %v219 = vsel %vm60, %v197, 0.0
    %220 = vadd.xlane.f32.xlu0 %v219
    %v221 = vpop.xlane.xlu0 %220
    %v223 = vsel %vm60, %v183, 0
    %v226 = vsel %vm60, %v185, 0
    %v229 = vsel %vm60, %v187, 0
    %v232 = vsel %vm60, %v189, 0
    %v235 = vsel %vm60, %v191, 0
    %v238 = vsel %vm60, %v193, 0
    %v241 = vsel %vm60, %v195, 0
    %v244 = vsel %vm60, %v197, 0
    %246 = vmatpush.msra.mxu0 0.0
    %247 = vmatpush.msra.mxu0 0.0
    %248 = vmatpush.msra.mxu0 0.0
    %249 = vmatpush.msra.mxu0 0.0
    %250 = vmatpush.msra.mxu0 0.0
    %251 = vmatpush.msra.mxu0 0.0
    %252 = vmatpush.msra.mxu0 0.0
    %253 = vmatpush.msra.mxu0 0.0
    %254 = vmatpush.msra.mxu0 %v59
    %255 = vmatpush.msra.mxu0 %v58
    %256 = vmatpush.msra.mxu0 %v57
    %257 = vmatpush.msra.mxu0 %v56
    %258 = vmatpush.msra.mxu0 %v55
    %259 = vmatpush.msra.mxu0 %v54
    %260 = vmatpush.msra.mxu0 %v53
    %261 = vmatpush.msra.mxu0 %v52
    %262 = vmatmul.f32.gmra.mxu0 %v223
    %v263 = vpop.f32.mrf.mxu0
    %v264 = vadd.f32 0.0, %v263
    %265 = vmatmul.f32.gmra.mxu0 %v226
    %v266 = vpop.f32.mrf.mxu0
    %v267 = vadd.f32 0.0, %v266
    %268 = vmatmul.f32.gmra.mxu0 %v229
    %v269 = vpop.f32.mrf.mxu0
    %v270 = vadd.f32 0.0, %v269
    %271 = vmatmul.f32.gmra.mxu0 %v232
    %v272 = vpop.f32.mrf.mxu0
    %v273 = vadd.f32 0.0, %v272
    %274 = vmatmul.f32.gmra.mxu0 %v235
    %v275 = vpop.f32.mrf.mxu0
    %v276 = vadd.f32 0.0, %v275
    %277 = vmatmul.f32.gmra.mxu0 %v238
    %v278 = vpop.f32.mrf.mxu0
    %v279 = vadd.f32 0.0, %v278
    %280 = vmatmul.f32.gmra.mxu0 %v241
    %v281 = vpop.f32.mrf.mxu0
    %v282 = vadd.f32 0.0, %v281
    %283 = vmatmul.f32.gmra.mxu0 %v244
    %v284 = vpop.f32.mrf.mxu0
    %v285 = vadd.f32 0.0, %v284
    %286 = vdwg.mxu0
    %v287 = vrcp.pop %v200
    %v288 = vmul.f32 %v200, %v287
    %v289 = vsub.f32 1.0, %v288
    %v290 = vmul.f32 %v287, %v289
    %v291 = vadd.f32 %v287, %v290
    %vm292 = vweird.f32 %v200
    %vm293 = vweird.f32 %v287
    %vm294 = vmor %vm292, %vm293
    %v295 = vsel %vm294, %v287, %v291
    %v296 = vand.u32 2147483647, %v200
    %vm297 = vcmp.eq.f32.partialorder %v296, 8.507059e+37
    %v298 = vand.u32 %v200, 2147483648
    %v299 = vor.u32 1.1754944e-38, %v298
    %v300 = vsel %vm297, %v299, %v295
    %v301 = vmul.f32 1.0, %v300
    %v302 = vrcp.pop %v203
    %v303 = vmul.f32 %v203, %v302
    %v304 = vsub.f32 1.0, %v303
    %v305 = vmul.f32 %v302, %v304
    %v306 = vadd.f32 %v302, %v305
    %vm307 = vweird.f32 %v203
    %vm308 = vweird.f32 %v302
    %vm309 = vmor %vm307, %vm308
    %v310 = vsel %vm309, %v302, %v306
    %v311 = vand.u32 2147483647, %v203
    %vm312 = vcmp.eq.f32.partialorder %v311, 8.507059e+37
    %v313 = vand.u32 %v203, 2147483648
    %v314 = vor.u32 1.1754944e-38, %v313
    %v315 = vsel %vm312, %v314, %v310
    %v316 = vmul.f32 1.0, %v315
    %v317 = vrcp.pop %v206
    %v318 = vmul.f32 %v206, %v317
    %v319 = vsub.f32 1.0, %v318
    %v320 = vmul.f32 %v317, %v319
    %v321 = vadd.f32 %v317, %v320
    %vm322 = vweird.f32 %v206
    %vm323 = vweird.f32 %v317
    %vm324 = vmor %vm322, %vm323
    %v325 = vsel %vm324, %v317, %v321
    %v326 = vand.u32 2147483647, %v206
    %vm327 = vcmp.eq.f32.partialorder %v326, 8.507059e+37
    %v328 = vand.u32 %v206, 2147483648
    %v329 = vor.u32 1.1754944e-38, %v328
    %v330 = vsel %vm327, %v329, %v325
    %v331 = vmul.f32 1.0, %v330
    %v332 = vrcp.pop %v209
    %v333 = vmul.f32 %v209, %v332
    %v334 = vsub.f32 1.0, %v333
    %v335 = vmul.f32 %v332, %v334
    %v336 = vadd.f32 %v332, %v335
    %vm337 = vweird.f32 %v209
    %vm338 = vweird.f32 %v332
    %vm339 = vmor %vm337, %vm338
    %v340 = vsel %vm339, %v332, %v336
    %v341 = vand.u32 2147483647, %v209
    %vm342 = vcmp.eq.f32.partialorder %v341, 8.507059e+37
    %v343 = vand.u32 %v209, 2147483648
    %v344 = vor.u32 1.1754944e-38, %v343
    %v345 = vsel %vm342, %v344, %v340
    %v346 = vmul.f32 1.0, %v345
    %v347 = vrcp.pop %v212
    %v348 = vmul.f32 %v212, %v347
    %v349 = vsub.f32 1.0, %v348
    %v350 = vmul.f32 %v347, %v349
    %v351 = vadd.f32 %v347, %v350
    %vm352 = vweird.f32 %v212
    %vm353 = vweird.f32 %v347
    %vm354 = vmor %vm352, %vm353
    %v355 = vsel %vm354, %v347, %v351
    %v356 = vand.u32 2147483647, %v212
    %vm357 = vcmp.eq.f32.partialorder %v356, 8.507059e+37
    %v358 = vand.u32 %v212, 2147483648
    %v359 = vor.u32 1.1754944e-38, %v358
    %v360 = vsel %vm357, %v359, %v355
    %v361 = vmul.f32 1.0, %v360
    %v362 = vrcp.pop %v215
    %v363 = vmul.f32 %v215, %v362
    %v364 = vsub.f32 1.0, %v363
    %v365 = vmul.f32 %v362, %v364
    %v366 = vadd.f32 %v362, %v365
    %vm367 = vweird.f32 %v215
    %vm368 = vweird.f32 %v362
    %vm369 = vmor %vm367, %vm368
    %v370 = vsel %vm369, %v362, %v366
    %v371 = vand.u32 2147483647, %v215
    %vm372 = vcmp.eq.f32.partialorder %v371, 8.507059e+37
    %v373 = vand.u32 %v215, 2147483648
    %v374 = vor.u32 1.1754944e-38, %v373
    %v375 = vsel %vm372, %v374, %v370
    %v376 = vmul.f32 1.0, %v375
    %v377 = vrcp.pop %v218
    %v378 = vmul.f32 %v218, %v377
    %v379 = vsub.f32 1.0, %v378
    %v380 = vmul.f32 %v377, %v379
    %v381 = vadd.f32 %v377, %v380
    %vm382 = vweird.f32 %v218
    %vm383 = vweird.f32 %v377
    %vm384 = vmor %vm382, %vm383
    %v385 = vsel %vm384, %v377, %v381
    %v386 = vand.u32 2147483647, %v218
    %vm387 = vcmp.eq.f32.partialorder %v386, 8.507059e+37
    %v388 = vand.u32 %v218, 2147483648
    %v389 = vor.u32 1.1754944e-38, %v388
    %v390 = vsel %vm387, %v389, %v385
    %v391 = vmul.f32 1.0, %v390
    %v392 = vrcp.pop %v221
    %v393 = vmul.f32 %v221, %v392
    %v394 = vsub.f32 1.0, %v393
    %v395 = vmul.f32 %v392, %v394
    %v396 = vadd.f32 %v392, %v395
    %vm397 = vweird.f32 %v221
    %vm398 = vweird.f32 %v392
    %vm399 = vmor %vm397, %vm398
    %v400 = vsel %vm399, %v392, %v396
    %v401 = vand.u32 2147483647, %v221
    %vm402 = vcmp.eq.f32.partialorder %v401, 8.507059e+37
    %v403 = vand.u32 %v221, 2147483648
    %v404 = vor.u32 1.1754944e-38, %v403
    %v405 = vsel %vm402, %v404, %v400
    %v406 = vmul.f32 1.0, %v405
    %v407 = vmul.f32 %v264, %v301
    %v408 = vmul.f32 %v267, %v316
    %v409 = vmul.f32 %v270, %v331
    %v410 = vmul.f32 %v273, %v346
    %v411 = vmul.f32 %v276, %v361
    %v412 = vmul.f32 %v279, %v376
    %v413 = vmul.f32 %v282, %v391
    %v414 = vmul.f32 %v285, %v406
    %s415 = scalar_lea.vmem [#allocation2], 64
    %v416 = vld [vmem:[%s415] sm:$0xff]
    %v417 = vld [vmem:[%s415 + $0x8] sm:$0xff]
    %v418 = vld [vmem:[%s415 + $0x10] sm:$0xff]
    %v419 = vld [vmem:[%s415 + $0x18] sm:$0xff]
    %v420 = vld [vmem:[%s415 + $0x20] sm:$0xff]
    %v421 = vld [vmem:[%s415 + $0x28] sm:$0xff]
    %v422 = vld [vmem:[%s415 + $0x30] sm:$0xff]
    %v423 = vld [vmem:[%s415 + $0x38] sm:$0xff]
    %s424 = scalar_lea.vmem [#allocation5], 64
    %v425 = vld [vmem:[%s424] sm:$0xff]
    %v426 = vld [vmem:[%s424 + $0x8] sm:$0xff]
    %v427 = vld [vmem:[%s424 + $0x10] sm:$0xff]
    %v428 = vld [vmem:[%s424 + $0x18] sm:$0xff]
    %v429 = vld [vmem:[%s424 + $0x20] sm:$0xff]
    %v430 = vld [vmem:[%s424 + $0x28] sm:$0xff]
    %v431 = vld [vmem:[%s424 + $0x30] sm:$0xff]
    %v432 = vld [vmem:[%s424 + $0x38] sm:$0xff]
    %v434 = vsel %vm60, %v416, 0
    %v437 = vsel %vm60, %v417, 0
    %v440 = vsel %vm60, %v418, 0
    %v443 = vsel %vm60, %v419, 0
    %v446 = vsel %vm60, %v420, 0
    %v449 = vsel %vm60, %v421, 0
    %v452 = vsel %vm60, %v422, 0
    %v455 = vsel %vm60, %v423, 0
    %v458 = vsel %vm60, %v425, 0
    %v461 = vsel %vm60, %v426, 0
    %v464 = vsel %vm60, %v427, 0
    %v467 = vsel %vm60, %v428, 0
    %v470 = vsel %vm60, %v429, 0
    %v473 = vsel %vm60, %v430, 0
    %v476 = vsel %vm60, %v431, 0
    %v479 = vsel %vm60, %v432, 0
    %481 = vmatpush.xpose.msra.mxu0 0.0
    %482 = vmatpush.xpose.msra.mxu0 0.0
    %483 = vmatpush.xpose.msra.mxu0 0.0
    %484 = vmatpush.xpose.msra.mxu0 0.0
    %485 = vmatpush.xpose.msra.mxu0 0.0
    %486 = vmatpush.xpose.msra.mxu0 0.0
    %487 = vmatpush.xpose.msra.mxu0 0.0
    %488 = vmatpush.xpose.msra.mxu0 0.0
    %489 = vmatpush.xpose.msra.mxu0 %v479
    %490 = vmatpush.xpose.msra.mxu0 %v476
    %491 = vmatpush.xpose.msra.mxu0 %v473
    %492 = vmatpush.xpose.msra.mxu0 %v470
    %493 = vmatpush.xpose.msra.mxu0 %v467
    %494 = vmatpush.xpose.msra.mxu0 %v464
    %495 = vmatpush.xpose.msra.mxu0 %v461
    %496 = vmatpush.xpose.msra.mxu0 %v458
    %497 = vmatmul.f32.gmra.mxu0 %v434
    %v498 = vpop.f32.mrf.mxu0
    %v499 = vadd.f32 0.0, %v498
    %500 = vmatmul.f32.gmra.mxu0 %v437
    %v501 = vpop.f32.mrf.mxu0
    %v502 = vadd.f32 0.0, %v501
    %503 = vmatmul.f32.gmra.mxu0 %v440
    %v504 = vpop.f32.mrf.mxu0
    %v505 = vadd.f32 0.0, %v504
    %506 = vmatmul.f32.gmra.mxu0 %v443
    %v507 = vpop.f32.mrf.mxu0
    %v508 = vadd.f32 0.0, %v507
    %509 = vmatmul.f32.gmra.mxu0 %v446
    %v510 = vpop.f32.mrf.mxu0
    %v511 = vadd.f32 0.0, %v510
    %512 = vmatmul.f32.gmra.mxu0 %v449
    %v513 = vpop.f32.mrf.mxu0
    %v514 = vadd.f32 0.0, %v513
    %515 = vmatmul.f32.gmra.mxu0 %v452
    %v516 = vpop.f32.mrf.mxu0
    %v517 = vadd.f32 0.0, %v516
    %518 = vmatmul.f32.gmra.mxu0 %v455
    %v519 = vpop.f32.mrf.mxu0
    %v520 = vadd.f32 0.0, %v519
    %521 = vdwg.mxu0
    %v522 = vsel %vm60, %v499, -inf
    %523 = vmax.xlane.f32.xlu0 %v522
    %v524 = vpop.xlane.xlu0 %523
    %v525 = vsel %vm60, %v502, -inf
    %526 = vmax.xlane.f32.xlu0 %v525
    %v527 = vpop.xlane.xlu0 %526
    %v528 = vsel %vm60, %v505, -inf
    %529 = vmax.xlane.f32.xlu0 %v528
    %v530 = vpop.xlane.xlu0 %529
    %v531 = vsel %vm60, %v508, -inf
    %532 = vmax.xlane.f32.xlu0 %v531
    %v533 = vpop.xlane.xlu0 %532
    %v534 = vsel %vm60, %v511, -inf
    %535 = vmax.xlane.f32.xlu0 %v534
    %v536 = vpop.xlane.xlu0 %535
    %v537 = vsel %vm60, %v514, -inf
    %538 = vmax.xlane.f32.xlu0 %v537
    %v539 = vpop.xlane.xlu0 %538
    %v540 = vsel %vm60, %v517, -inf
    %541 = vmax.xlane.f32.xlu0 %v540
    %v542 = vpop.xlane.xlu0 %541
    %v543 = vsel %vm60, %v520, -inf
    %544 = vmax.xlane.f32.xlu0 %v543
    %v545 = vpop.xlane.xlu0 %544
    %v546 = vsub.f32 %v499, %v524
    %v547 = vsub.f32 %v502, %v527
    %v548 = vsub.f32 %v505, %v530
    %v549 = vsub.f32 %v508, %v533
    %v550 = vsub.f32 %v511, %v536
    %v551 = vsub.f32 %v514, %v539
    %v552 = vsub.f32 %v517, %v542
    %v553 = vsub.f32 %v520, %v545
    %v554 = vmul.f32 %v546, 1.442695
    %v555 = vpow.pop %v554
    %v556 = vmul.f32 %v547, 1.442695
    %v557 = vpow.pop %v556
    %v558 = vmul.f32 %v548, 1.442695
    %v559 = vpow.pop %v558
    %v560 = vmul.f32 %v549, 1.442695
    %v561 = vpow.pop %v560
    %v562 = vmul.f32 %v550, 1.442695
    %v563 = vpow.pop %v562
    %v564 = vmul.f32 %v551, 1.442695
    %v565 = vpow.pop %v564
    %v566 = vmul.f32 %v552, 1.442695
    %v567 = vpow.pop %v566
    %v568 = vmul.f32 %v553, 1.442695
    %v569 = vpow.pop %v568
    %v570 = vsel %vm60, %v555, 0.0
    %571 = vadd.xlane.f32.xlu0 %v570
    %v572 = vpop.xlane.xlu0 %571
    %v573 = vsel %vm60, %v557, 0.0
    %574 = vadd.xlane.f32.xlu0 %v573
    %v575 = vpop.xlane.xlu0 %574
    %v576 = vsel %vm60, %v559, 0.0
    %577 = vadd.xlane.f32.xlu0 %v576
    %v578 = vpop.xlane.xlu0 %577
    %v579 = vsel %vm60, %v561, 0.0
    %580 = vadd.xlane.f32.xlu0 %v579
    %v581 = vpop.xlane.xlu0 %580
    %v582 = vsel %vm60, %v563, 0.0
    %583 = vadd.xlane.f32.xlu0 %v582
    %v584 = vpop.xlane.xlu0 %583
    %v585 = vsel %vm60, %v565, 0.0
    %586 = vadd.xlane.f32.xlu0 %v585
    %v587 = vpop.xlane.xlu0 %586
    %v588 = vsel %vm60, %v567, 0.0
    %589 = vadd.xlane.f32.xlu0 %v588
    %v590 = vpop.xlane.xlu0 %589
    %v591 = vsel %vm60, %v569, 0.0
    %592 = vadd.xlane.f32.xlu0 %v591
    %v593 = vpop.xlane.xlu0 %592
    %v595 = vsel %vm60, %v555, 0
    %v598 = vsel %vm60, %v557, 0
    %v601 = vsel %vm60, %v559, 0
    %v604 = vsel %vm60, %v561, 0
    %v607 = vsel %vm60, %v563, 0
    %v610 = vsel %vm60, %v565, 0
    %v613 = vsel %vm60, %v567, 0
    %v616 = vsel %vm60, %v569, 0
    %618 = vmatpush.msra.mxu0 0.0
    %619 = vmatpush.msra.mxu0 0.0
    %620 = vmatpush.msra.mxu0 0.0
    %621 = vmatpush.msra.mxu0 0.0
    %622 = vmatpush.msra.mxu0 0.0
    %623 = vmatpush.msra.mxu0 0.0
    %624 = vmatpush.msra.mxu0 0.0
    %625 = vmatpush.msra.mxu0 0.0
    %626 = vmatpush.msra.mxu0 %v432
    %627 = vmatpush.msra.mxu0 %v431
    %628 = vmatpush.msra.mxu0 %v430
    %629 = vmatpush.msra.mxu0 %v429
    %630 = vmatpush.msra.mxu0 %v428
    %631 = vmatpush.msra.mxu0 %v427
    %632 = vmatpush.msra.mxu0 %v426
    %633 = vmatpush.msra.mxu0 %v425
    %634 = vmatmul.f32.gmra.mxu0 %v595
    %v635 = vpop.f32.mrf.mxu0
    %v636 = vadd.f32 0.0, %v635
    %637 = vmatmul.f32.gmra.mxu0 %v598
    %v638 = vpop.f32.mrf.mxu0
    %v639 = vadd.f32 0.0, %v638
    %640 = vmatmul.f32.gmra.mxu0 %v601
    %v641 = vpop.f32.mrf.mxu0
    %v642 = vadd.f32 0.0, %v641
    %643 = vmatmul.f32.gmra.mxu0 %v604
    %v644 = vpop.f32.mrf.mxu0
    %v645 = vadd.f32 0.0, %v644
    %646 = vmatmul.f32.gmra.mxu0 %v607
    %v647 = vpop.f32.mrf.mxu0
    %v648 = vadd.f32 0.0, %v647
    %649 = vmatmul.f32.gmra.mxu0 %v610
    %v650 = vpop.f32.mrf.mxu0
    %v651 = vadd.f32 0.0, %v650
    %652 = vmatmul.f32.gmra.mxu0 %v613
    %v653 = vpop.f32.mrf.mxu0
    %v654 = vadd.f32 0.0, %v653
    %655 = vmatmul.f32.gmra.mxu0 %v616
    %v656 = vpop.f32.mrf.mxu0
    %v657 = vadd.f32 0.0, %v656
    %658 = vdwg.mxu0
    %v659 = vrcp.pop %v572
    %v660 = vmul.f32 %v572, %v659
    %v661 = vsub.f32 1.0, %v660
    %v662 = vmul.f32 %v659, %v661
    %v663 = vadd.f32 %v659, %v662
    %vm664 = vweird.f32 %v572
    %vm665 = vweird.f32 %v659
    %vm666 = vmor %vm664, %vm665
    %v667 = vsel %vm666, %v659, %v663
    %v668 = vand.u32 2147483647, %v572
    %vm669 = vcmp.eq.f32.partialorder %v668, 8.507059e+37
    %v670 = vand.u32 %v572, 2147483648
    %v671 = vor.u32 1.1754944e-38, %v670
    %v672 = vsel %vm669, %v671, %v667
    %v673 = vmul.f32 1.0, %v672
    %v674 = vrcp.pop %v575
    %v675 = vmul.f32 %v575, %v674
    %v676 = vsub.f32 1.0, %v675
    %v677 = vmul.f32 %v674, %v676
    %v678 = vadd.f32 %v674, %v677
    %vm679 = vweird.f32 %v575
    %vm680 = vweird.f32 %v674
    %vm681 = vmor %vm679, %vm680
    %v682 = vsel %vm681, %v674, %v678
    %v683 = vand.u32 2147483647, %v575
    %vm684 = vcmp.eq.f32.partialorder %v683, 8.507059e+37
    %v685 = vand.u32 %v575, 2147483648
    %v686 = vor.u32 1.1754944e-38, %v685
    %v687 = vsel %vm684, %v686, %v682
    %v688 = vmul.f32 1.0, %v687
    %v689 = vrcp.pop %v578
    %v690 = vmul.f32 %v578, %v689
    %v691 = vsub.f32 1.0, %v690
    %v692 = vmul.f32 %v689, %v691
    %v693 = vadd.f32 %v689, %v692
    %vm694 = vweird.f32 %v578
    %vm695 = vweird.f32 %v689
    %vm696 = vmor %vm694, %vm695
    %v697 = vsel %vm696, %v689, %v693
    %v698 = vand.u32 2147483647, %v578
    %vm699 = vcmp.eq.f32.partialorder %v698, 8.507059e+37
    %v700 = vand.u32 %v578, 2147483648
    %v701 = vor.u32 1.1754944e-38, %v700
    %v702 = vsel %vm699, %v701, %v697
    %v703 = vmul.f32 1.0, %v702
    %v704 = vrcp.pop %v581
    %v705 = vmul.f32 %v581, %v704
    %v706 = vsub.f32 1.0, %v705
    %v707 = vmul.f32 %v704, %v706
    %v708 = vadd.f32 %v704, %v707
    %vm709 = vweird.f32 %v581
    %vm710 = vweird.f32 %v704
    %vm711 = vmor %vm709, %vm710
    %v712 = vsel %vm711, %v704, %v708
    %v713 = vand.u32 2147483647, %v581
    %vm714 = vcmp.eq.f32.partialorder %v713, 8.507059e+37
    %v715 = vand.u32 %v581, 2147483648
    %v716 = vor.u32 1.1754944e-38, %v715
    %v717 = vsel %vm714, %v716, %v712
    %v718 = vmul.f32 1.0, %v717
    %v719 = vrcp.pop %v584
    %v720 = vmul.f32 %v584, %v719
    %v721 = vsub.f32 1.0, %v720
    %v722 = vmul.f32 %v719, %v721
    %v723 = vadd.f32 %v719, %v722
    %vm724 = vweird.f32 %v584
    %vm725 = vweird.f32 %v719
    %vm726 = vmor %vm724, %vm725
    %v727 = vsel %vm726, %v719, %v723
    %v728 = vand.u32 2147483647, %v584
    %vm729 = vcmp.eq.f32.partialorder %v728, 8.507059e+37
    %v730 = vand.u32 %v584, 2147483648
    %v731 = vor.u32 1.1754944e-38, %v730
    %v732 = vsel %vm729, %v731, %v727
    %v733 = vmul.f32 1.0, %v732
    %v734 = vrcp.pop %v587
    %v735 = vmul.f32 %v587, %v734
    %v736 = vsub.f32 1.0, %v735
    %v737 = vmul.f32 %v734, %v736
    %v738 = vadd.f32 %v734, %v737
    %vm739 = vweird.f32 %v587
    %vm740 = vweird.f32 %v734
    %vm741 = vmor %vm739, %vm740
    %v742 = vsel %vm741, %v734, %v738
    %v743 = vand.u32 2147483647, %v587
    %vm744 = vcmp.eq.f32.partialorder %v743, 8.507059e+37
    %v745 = vand.u32 %v587, 2147483648
    %v746 = vor.u32 1.1754944e-38, %v745
    %v747 = vsel %vm744, %v746, %v742
    %v748 = vmul.f32 1.0, %v747
    %v749 = vrcp.pop %v590
    %v750 = vmul.f32 %v590, %v749
    %v751 = vsub.f32 1.0, %v750
    %v752 = vmul.f32 %v749, %v751
    %v753 = vadd.f32 %v749, %v752
    %vm754 = vweird.f32 %v590
    %vm755 = vweird.f32 %v749
    %vm756 = vmor %vm754, %vm755
    %v757 = vsel %vm756, %v749, %v753
    %v758 = vand.u32 2147483647, %v590
    %vm759 = vcmp.eq.f32.partialorder %v758, 8.507059e+37
    %v760 = vand.u32 %v590, 2147483648
    %v761 = vor.u32 1.1754944e-38, %v760
    %v762 = vsel %vm759, %v761, %v757
    %v763 = vmul.f32 1.0, %v762
    %v764 = vrcp.pop %v593
    %v765 = vmul.f32 %v593, %v764
    %v766 = vsub.f32 1.0, %v765
    %v767 = vmul.f32 %v764, %v766
    %v768 = vadd.f32 %v764, %v767
    %vm769 = vweird.f32 %v593
    %vm770 = vweird.f32 %v764
    %vm771 = vmor %vm769, %vm770
    %v772 = vsel %vm771, %v764, %v768
    %v773 = vand.u32 2147483647, %v593
    %vm774 = vcmp.eq.f32.partialorder %v773, 8.507059e+37
    %v775 = vand.u32 %v593, 2147483648
    %v776 = vor.u32 1.1754944e-38, %v775
    %v777 = vsel %vm774, %v776, %v772
    %v778 = vmul.f32 1.0, %v777
    %v779 = vmul.f32 %v636, %v673
    %v780 = vmul.f32 %v639, %v688
    %v781 = vmul.f32 %v642, %v703
    %v782 = vmul.f32 %v645, %v718
    %v783 = vmul.f32 %v648, %v733
    %v784 = vmul.f32 %v651, %v748
    %v785 = vmul.f32 %v654, %v763
    %v786 = vmul.f32 %v657, %v778
    %795 = vrot.lane.b32.xlu0 %v779, 64
    %v796 = vpop.permute.xlu0 %795
    %797 = vrot.lane.b32.xlu0 %v780, 64
    %v798 = vpop.permute.xlu0 %797
    %799 = vrot.lane.b32.xlu0 %v781, 64
    %v800 = vpop.permute.xlu0 %799
    %801 = vrot.lane.b32.xlu0 %v782, 64
    %v802 = vpop.permute.xlu0 %801
    %803 = vrot.lane.b32.xlu0 %v783, 64
    %v804 = vpop.permute.xlu0 %803
    %805 = vrot.lane.b32.xlu0 %v784, 64
    %v806 = vpop.permute.xlu0 %805
    %807 = vrot.lane.b32.xlu0 %v785, 64
    %v808 = vpop.permute.xlu0 %807
    %809 = vrot.lane.b32.xlu0 %v786, 64
    %v810 = vpop.permute.xlu0 %809
    %v819 = vsel %vm60, %v407, %v796
    %v820 = vsel %vm60, %v408, %v798
    %v821 = vsel %vm60, %v409, %v800
    %v822 = vsel %vm60, %v410, %v802
    %v823 = vsel %vm60, %v411, %v804
    %v824 = vsel %vm60, %v412, %v806
    %v825 = vsel %vm60, %v413, %v808
    %v826 = vsel %vm60, %v414, %v810
    %827 = vst [vmem:[#allocation7] sm:$0xff] %v819
    %828 = vst [vmem:[#allocation7 + $0x18] sm:$0xff] %v820
    %829 = vst [vmem:[#allocation7 + $0x30] sm:$0xff] %v821
    %830 = vst [vmem:[#allocation7 + $0x48] sm:$0xff] %v822
    %831 = vst [vmem:[#allocation7 + $0x60] sm:$0xff] %v823
    %832 = vst [vmem:[#allocation7 + $0x78] sm:$0xff] %v824
    %833 = vst [vmem:[#allocation7 + $0x90] sm:$0xff] %v825
    %834 = vst [vmem:[#allocation7 + $0xa8] sm:$0xff] %v826
    %s835 = scalar_lea.vmem [#allocation2], 128
    %v836 = vld [vmem:[%s835] sm:$0xff]
    %v837 = vld [vmem:[%s835 + $0x8] sm:$0xff]
    %v838 = vld [vmem:[%s835 + $0x10] sm:$0xff]
    %v839 = vld [vmem:[%s835 + $0x18] sm:$0xff]
    %v840 = vld [vmem:[%s835 + $0x20] sm:$0xff]
    %v841 = vld [vmem:[%s835 + $0x28] sm:$0xff]
    %v842 = vld [vmem:[%s835 + $0x30] sm:$0xff]
    %v843 = vld [vmem:[%s835 + $0x38] sm:$0xff]
    %s844 = scalar_lea.vmem [#allocation5], 128
    %v845 = vld [vmem:[%s844] sm:$0xff]
    %v846 = vld [vmem:[%s844 + $0x8] sm:$0xff]
    %v847 = vld [vmem:[%s844 + $0x10] sm:$0xff]
    %v848 = vld [vmem:[%s844 + $0x18] sm:$0xff]
    %v849 = vld [vmem:[%s844 + $0x20] sm:$0xff]
    %v850 = vld [vmem:[%s844 + $0x28] sm:$0xff]
    %v851 = vld [vmem:[%s844 + $0x30] sm:$0xff]
    %v852 = vld [vmem:[%s844 + $0x38] sm:$0xff]
    %v854 = vsel %vm60, %v836, 0
    %v857 = vsel %vm60, %v837, 0
    %v860 = vsel %vm60, %v838, 0
    %v863 = vsel %vm60, %v839, 0
    %v866 = vsel %vm60, %v840, 0
    %v869 = vsel %vm60, %v841, 0
    %v872 = vsel %vm60, %v842, 0
    %v875 = vsel %vm60, %v843, 0
    %v878 = vsel %vm60, %v845, 0
    %v881 = vsel %vm60, %v846, 0
    %v884 = vsel %vm60, %v847, 0
    %v887 = vsel %vm60, %v848, 0
    %v890 = vsel %vm60, %v849, 0
    %v893 = vsel %vm60, %v850, 0
    %v896 = vsel %vm60, %v851, 0
    %v899 = vsel %vm60, %v852, 0
    %901 = vmatpush.xpose.msra.mxu0 0.0
    %902 = vmatpush.xpose.msra.mxu0 0.0
    %903 = vmatpush.xpose.msra.mxu0 0.0
    %904 = vmatpush.xpose.msra.mxu0 0.0
    %905 = vmatpush.xpose.msra.mxu0 0.0
    %906 = vmatpush.xpose.msra.mxu0 0.0
    %907 = vmatpush.xpose.msra.mxu0 0.0
    %908 = vmatpush.xpose.msra.mxu0 0.0
    %909 = vmatpush.xpose.msra.mxu0 %v899
    %910 = vmatpush.xpose.msra.mxu0 %v896
    %911 = vmatpush.xpose.msra.mxu0 %v893
    %912 = vmatpush.xpose.msra.mxu0 %v890
    %913 = vmatpush.xpose.msra.mxu0 %v887
    %914 = vmatpush.xpose.msra.mxu0 %v884
    %915 = vmatpush.xpose.msra.mxu0 %v881
    %916 = vmatpush.xpose.msra.mxu0 %v878
    %917 = vmatmul.f32.gmra.mxu0 %v854
    %v918 = vpop.f32.mrf.mxu0
    %v919 = vadd.f32 0.0, %v918
    %920 = vmatmul.f32.gmra.mxu0 %v857
    %v921 = vpop.f32.mrf.mxu0
    %v922 = vadd.f32 0.0, %v921
    %923 = vmatmul.f32.gmra.mxu0 %v860
    %v924 = vpop.f32.mrf.mxu0
    %v925 = vadd.f32 0.0, %v924
    %926 = vmatmul.f32.gmra.mxu0 %v863
    %v927 = vpop.f32.mrf.mxu0
    %v928 = vadd.f32 0.0, %v927
    %929 = vmatmul.f32.gmra.mxu0 %v866
    %v930 = vpop.f32.mrf.mxu0
    %v931 = vadd.f32 0.0, %v930
    %932 = vmatmul.f32.gmra.mxu0 %v869
    %v933 = vpop.f32.mrf.mxu0
    %v934 = vadd.f32 0.0, %v933
    %935 = vmatmul.f32.gmra.mxu0 %v872
    %v936 = vpop.f32.mrf.mxu0
    %v937 = vadd.f32 0.0, %v936
    %938 = vmatmul.f32.gmra.mxu0 %v875
    %v939 = vpop.f32.mrf.mxu0
    %v940 = vadd.f32 0.0, %v939
    %941 = vdwg.mxu0
    %v942 = vsel %vm60, %v919, -inf
    %943 = vmax.xlane.f32.xlu0 %v942
    %v944 = vpop.xlane.xlu0 %943
    %v945 = vsel %vm60, %v922, -inf
    %946 = vmax.xlane.f32.xlu0 %v945
    %v947 = vpop.xlane.xlu0 %946
    %v948 = vsel %vm60, %v925, -inf
    %949 = vmax.xlane.f32.xlu0 %v948
    %v950 = vpop.xlane.xlu0 %949
    %v951 = vsel %vm60, %v928, -inf
    %952 = vmax.xlane.f32.xlu0 %v951
    %v953 = vpop.xlane.xlu0 %952
    %v954 = vsel %vm60, %v931, -inf
    %955 = vmax.xlane.f32.xlu0 %v954
    %v956 = vpop.xlane.xlu0 %955
    %v957 = vsel %vm60, %v934, -inf
    %958 = vmax.xlane.f32.xlu0 %v957
    %v959 = vpop.xlane.xlu0 %958
    %v960 = vsel %vm60, %v937, -inf
    %961 = vmax.xlane.f32.xlu0 %v960
    %v962 = vpop.xlane.xlu0 %961
    %v963 = vsel %vm60, %v940, -inf
    %964 = vmax.xlane.f32.xlu0 %v963
    %v965 = vpop.xlane.xlu0 %964
    %v966 = vsub.f32 %v919, %v944
    %v967 = vsub.f32 %v922, %v947
    %v968 = vsub.f32 %v925, %v950
    %v969 = vsub.f32 %v928, %v953
    %v970 = vsub.f32 %v931, %v956
    %v971 = vsub.f32 %v934, %v959
    %v972 = vsub.f32 %v937, %v962
    %v973 = vsub.f32 %v940, %v965
    %v974 = vmul.f32 %v966, 1.442695
    %v975 = vpow.pop %v974
    %v976 = vmul.f32 %v967, 1.442695
    %v977 = vpow.pop %v976
    %v978 = vmul.f32 %v968, 1.442695
    %v979 = vpow.pop %v978
    %v980 = vmul.f32 %v969, 1.442695
    %v981 = vpow.pop %v980
    %v982 = vmul.f32 %v970, 1.442695
    %v983 = vpow.pop %v982
    %v984 = vmul.f32 %v971, 1.442695
    %v985 = vpow.pop %v984
    %v986 = vmul.f32 %v972, 1.442695
    %v987 = vpow.pop %v986
    %v988 = vmul.f32 %v973, 1.442695
    %v989 = vpow.pop %v988
    %v990 = vsel %vm60, %v975, 0.0
    %991 = vadd.xlane.f32.xlu0 %v990
    %v992 = vpop.xlane.xlu0 %991
    %v993 = vsel %vm60, %v977, 0.0
    %994 = vadd.xlane.f32.xlu0 %v993
    %v995 = vpop.xlane.xlu0 %994
    %v996 = vsel %vm60, %v979, 0.0
    %997 = vadd.xlane.f32.xlu0 %v996
    %v998 = vpop.xlane.xlu0 %997
    %v999 = vsel %vm60, %v981, 0.0
    %1000 = vadd.xlane.f32.xlu0 %v999
    %v1001 = vpop.xlane.xlu0 %1000
    %v1002 = vsel %vm60, %v983, 0.0
    %1003 = vadd.xlane.f32.xlu0 %v1002
    %v1004 = vpop.xlane.xlu0 %1003
    %v1005 = vsel %vm60, %v985, 0.0
    %1006 = vadd.xlane.f32.xlu0 %v1005
    %v1007 = vpop.xlane.xlu0 %1006
    %v1008 = vsel %vm60, %v987, 0.0
    %1009 = vadd.xlane.f32.xlu0 %v1008
    %v1010 = vpop.xlane.xlu0 %1009
    %v1011 = vsel %vm60, %v989, 0.0
    %1012 = vadd.xlane.f32.xlu0 %v1011
    %v1013 = vpop.xlane.xlu0 %1012
    %v1015 = vsel %vm60, %v975, 0
    %v1018 = vsel %vm60, %v977, 0
    %v1021 = vsel %vm60, %v979, 0
    %v1024 = vsel %vm60, %v981, 0
    %v1027 = vsel %vm60, %v983, 0
    %v1030 = vsel %vm60, %v985, 0
    %v1033 = vsel %vm60, %v987, 0
    %v1036 = vsel %vm60, %v989, 0
    %1038 = vmatpush.msra.mxu0 0.0
    %1039 = vmatpush.msra.mxu0 0.0
    %1040 = vmatpush.msra.mxu0 0.0
    %1041 = vmatpush.msra.mxu0 0.0
    %1042 = vmatpush.msra.mxu0 0.0
    %1043 = vmatpush.msra.mxu0 0.0
    %1044 = vmatpush.msra.mxu0 0.0
    %1045 = vmatpush.msra.mxu0 0.0
    %1046 = vmatpush.msra.mxu0 %v852
    %1047 = vmatpush.msra.mxu0 %v851
    %1048 = vmatpush.msra.mxu0 %v850
    %1049 = vmatpush.msra.mxu0 %v849
    %1050 = vmatpush.msra.mxu0 %v848
    %1051 = vmatpush.msra.mxu0 %v847
    %1052 = vmatpush.msra.mxu0 %v846
    %1053 = vmatpush.msra.mxu0 %v845
    %1054 = vmatmul.f32.gmra.mxu0 %v1015
    %v1055 = vpop.f32.mrf.mxu0
    %v1056 = vadd.f32 0.0, %v1055
    %1057 = vmatmul.f32.gmra.mxu0 %v1018
    %v1058 = vpop.f32.mrf.mxu0
    %v1059 = vadd.f32 0.0, %v1058
    %1060 = vmatmul.f32.gmra.mxu0 %v1021
    %v1061 = vpop.f32.mrf.mxu0
    %v1062 = vadd.f32 0.0, %v1061
    %1063 = vmatmul.f32.gmra.mxu0 %v1024
    %v1064 = vpop.f32.mrf.mxu0
    %v1065 = vadd.f32 0.0, %v1064
    %1066 = vmatmul.f32.gmra.mxu0 %v1027
    %v1067 = vpop.f32.mrf.mxu0
    %v1068 = vadd.f32 0.0, %v1067
    %1069 = vmatmul.f32.gmra.mxu0 %v1030
    %v1070 = vpop.f32.mrf.mxu0
    %v1071 = vadd.f32 0.0, %v1070
    %1072 = vmatmul.f32.gmra.mxu0 %v1033
    %v1073 = vpop.f32.mrf.mxu0
    %v1074 = vadd.f32 0.0, %v1073
    %1075 = vmatmul.f32.gmra.mxu0 %v1036
    %v1076 = vpop.f32.mrf.mxu0
    %v1077 = vadd.f32 0.0, %v1076
    %1078 = vdwg.mxu0
    %v1079 = vrcp.pop %v992
    %v1080 = vmul.f32 %v992, %v1079
    %v1081 = vsub.f32 1.0, %v1080
    %v1082 = vmul.f32 %v1079, %v1081
    %v1083 = vadd.f32 %v1079, %v1082
    %vm1084 = vweird.f32 %v992
    %vm1085 = vweird.f32 %v1079
    %vm1086 = vmor %vm1084, %vm1085
    %v1087 = vsel %vm1086, %v1079, %v1083
    %v1088 = vand.u32 2147483647, %v992
    %vm1089 = vcmp.eq.f32.partialorder %v1088, 8.507059e+37
    %v1090 = vand.u32 %v992, 2147483648
    %v1091 = vor.u32 1.1754944e-38, %v1090
    %v1092 = vsel %vm1089, %v1091, %v1087
    %v1093 = vmul.f32 1.0, %v1092
    %v1094 = vrcp.pop %v995
    %v1095 = vmul.f32 %v995, %v1094
    %v1096 = vsub.f32 1.0, %v1095
    %v1097 = vmul.f32 %v1094, %v1096
    %v1098 = vadd.f32 %v1094, %v1097
    %vm1099 = vweird.f32 %v995
    %vm1100 = vweird.f32 %v1094
    %vm1101 = vmor %vm1099, %vm1100
    %v1102 = vsel %vm1101, %v1094, %v1098
    %v1103 = vand.u32 2147483647, %v995
    %vm1104 = vcmp.eq.f32.partialorder %v1103, 8.507059e+37
    %v1105 = vand.u32 %v995, 2147483648
    %v1106 = vor.u32 1.1754944e-38, %v1105
    %v1107 = vsel %vm1104, %v1106, %v1102
    %v1108 = vmul.f32 1.0, %v1107
    %v1109 = vrcp.pop %v998
    %v1110 = vmul.f32 %v998, %v1109
    %v1111 = vsub.f32 1.0, %v1110
    %v1112 = vmul.f32 %v1109, %v1111
    %v1113 = vadd.f32 %v1109, %v1112
    %vm1114 = vweird.f32 %v998
    %vm1115 = vweird.f32 %v1109
    %vm1116 = vmor %vm1114, %vm1115
    %v1117 = vsel %vm1116, %v1109, %v1113
    %v1118 = vand.u32 2147483647, %v998
    %vm1119 = vcmp.eq.f32.partialorder %v1118, 8.507059e+37
    %v1120 = vand.u32 %v998, 2147483648
    %v1121 = vor.u32 1.1754944e-38, %v1120
    %v1122 = vsel %vm1119, %v1121, %v1117
    %v1123 = vmul.f32 1.0, %v1122
    %v1124 = vrcp.pop %v1001
    %v1125 = vmul.f32 %v1001, %v1124
    %v1126 = vsub.f32 1.0, %v1125
    %v1127 = vmul.f32 %v1124, %v1126
    %v1128 = vadd.f32 %v1124, %v1127
    %vm1129 = vweird.f32 %v1001
    %vm1130 = vweird.f32 %v1124
    %vm1131 = vmor %vm1129, %vm1130
    %v1132 = vsel %vm1131, %v1124, %v1128
    %v1133 = vand.u32 2147483647, %v1001
    %vm1134 = vcmp.eq.f32.partialorder %v1133, 8.507059e+37
    %v1135 = vand.u32 %v1001, 2147483648
    %v1136 = vor.u32 1.1754944e-38, %v1135
    %v1137 = vsel %vm1134, %v1136, %v1132
    %v1138 = vmul.f32 1.0, %v1137
    %v1139 = vrcp.pop %v1004
    %v1140 = vmul.f32 %v1004, %v1139
    %v1141 = vsub.f32 1.0, %v1140
    %v1142 = vmul.f32 %v1139, %v1141
    %v1143 = vadd.f32 %v1139, %v1142
    %vm1144 = vweird.f32 %v1004
    %vm1145 = vweird.f32 %v1139
    %vm1146 = vmor %vm1144, %vm1145
    %v1147 = vsel %vm1146, %v1139, %v1143
    %v1148 = vand.u32 2147483647, %v1004
    %vm1149 = vcmp.eq.f32.partialorder %v1148, 8.507059e+37
    %v1150 = vand.u32 %v1004, 2147483648
    %v1151 = vor.u32 1.1754944e-38, %v1150
    %v1152 = vsel %vm1149, %v1151, %v1147
    %v1153 = vmul.f32 1.0, %v1152
    %v1154 = vrcp.pop %v1007
    %v1155 = vmul.f32 %v1007, %v1154
    %v1156 = vsub.f32 1.0, %v1155
    %v1157 = vmul.f32 %v1154, %v1156
    %v1158 = vadd.f32 %v1154, %v1157
    %vm1159 = vweird.f32 %v1007
    %vm1160 = vweird.f32 %v1154
    %vm1161 = vmor %vm1159, %vm1160
    %v1162 = vsel %vm1161, %v1154, %v1158
    %v1163 = vand.u32 2147483647, %v1007
    %vm1164 = vcmp.eq.f32.partialorder %v1163, 8.507059e+37
    %v1165 = vand.u32 %v1007, 2147483648
    %v1166 = vor.u32 1.1754944e-38, %v1165
    %v1167 = vsel %vm1164, %v1166, %v1162
    %v1168 = vmul.f32 1.0, %v1167
    %v1169 = vrcp.pop %v1010
    %v1170 = vmul.f32 %v1010, %v1169
    %v1171 = vsub.f32 1.0, %v1170
    %v1172 = vmul.f32 %v1169, %v1171
    %v1173 = vadd.f32 %v1169, %v1172
    %vm1174 = vweird.f32 %v1010
    %vm1175 = vweird.f32 %v1169
    %vm1176 = vmor %vm1174, %vm1175
    %v1177 = vsel %vm1176, %v1169, %v1173
    %v1178 = vand.u32 2147483647, %v1010
    %vm1179 = vcmp.eq.f32.partialorder %v1178, 8.507059e+37
    %v1180 = vand.u32 %v1010, 2147483648
    %v1181 = vor.u32 1.1754944e-38, %v1180
    %v1182 = vsel %vm1179, %v1181, %v1177
    %v1183 = vmul.f32 1.0, %v1182
    %v1184 = vrcp.pop %v1013
    %v1185 = vmul.f32 %v1013, %v1184
    %v1186 = vsub.f32 1.0, %v1185
    %v1187 = vmul.f32 %v1184, %v1186
    %v1188 = vadd.f32 %v1184, %v1187
    %vm1189 = vweird.f32 %v1013
    %vm1190 = vweird.f32 %v1184
    %vm1191 = vmor %vm1189, %vm1190
    %v1192 = vsel %vm1191, %v1184, %v1188
    %v1193 = vand.u32 2147483647, %v1013
    %vm1194 = vcmp.eq.f32.partialorder %v1193, 8.507059e+37
    %v1195 = vand.u32 %v1013, 2147483648
    %v1196 = vor.u32 1.1754944e-38, %v1195
    %v1197 = vsel %vm1194, %v1196, %v1192
    %v1198 = vmul.f32 1.0, %v1197
    %v1199 = vmul.f32 %v1056, %v1093
    %v1200 = vmul.f32 %v1059, %v1108
    %v1201 = vmul.f32 %v1062, %v1123
    %v1202 = vmul.f32 %v1065, %v1138
    %v1203 = vmul.f32 %v1068, %v1153
    %v1204 = vmul.f32 %v1071, %v1168
    %v1205 = vmul.f32 %v1074, %v1183
    %v1206 = vmul.f32 %v1077, %v1198
    %s1207 = scalar_lea.vmem [#allocation2], 192
    %v1208 = vld [vmem:[%s1207] sm:$0xff]
    %v1209 = vld [vmem:[%s1207 + $0x8] sm:$0xff]
    %v1210 = vld [vmem:[%s1207 + $0x10] sm:$0xff]
    %v1211 = vld [vmem:[%s1207 + $0x18] sm:$0xff]
    %v1212 = vld [vmem:[%s1207 + $0x20] sm:$0xff]
    %v1213 = vld [vmem:[%s1207 + $0x28] sm:$0xff]
    %v1214 = vld [vmem:[%s1207 + $0x30] sm:$0xff]
    %v1215 = vld [vmem:[%s1207 + $0x38] sm:$0xff]
    %s1216 = scalar_lea.vmem [#allocation5], 192
    %v1217 = vld [vmem:[%s1216] sm:$0xff]
    %v1218 = vld [vmem:[%s1216 + $0x8] sm:$0xff]
    %v1219 = vld [vmem:[%s1216 + $0x10] sm:$0xff]
    %v1220 = vld [vmem:[%s1216 + $0x18] sm:$0xff]
    %v1221 = vld [vmem:[%s1216 + $0x20] sm:$0xff]
    %v1222 = vld [vmem:[%s1216 + $0x28] sm:$0xff]
    %v1223 = vld [vmem:[%s1216 + $0x30] sm:$0xff]
    %v1224 = vld [vmem:[%s1216 + $0x38] sm:$0xff]
    %v1226 = vsel %vm60, %v1208, 0
    %v1229 = vsel %vm60, %v1209, 0
    %v1232 = vsel %vm60, %v1210, 0
    %v1235 = vsel %vm60, %v1211, 0
    %v1238 = vsel %vm60, %v1212, 0
    %v1241 = vsel %vm60, %v1213, 0
    %v1244 = vsel %vm60, %v1214, 0
    %v1247 = vsel %vm60, %v1215, 0
    %v1250 = vsel %vm60, %v1217, 0
    %v1253 = vsel %vm60, %v1218, 0
    %v1256 = vsel %vm60, %v1219, 0
    %v1259 = vsel %vm60, %v1220, 0
    %v1262 = vsel %vm60, %v1221, 0
    %v1265 = vsel %vm60, %v1222, 0
    %v1268 = vsel %vm60, %v1223, 0
    %v1271 = vsel %vm60, %v1224, 0
    %1273 = vmatpush.xpose.msra.mxu0 0.0
    %1274 = vmatpush.xpose.msra.mxu0 0.0
    %1275 = vmatpush.xpose.msra.mxu0 0.0
    %1276 = vmatpush.xpose.msra.mxu0 0.0
    %1277 = vmatpush.xpose.msra.mxu0 0.0
    %1278 = vmatpush.xpose.msra.mxu0 0.0
    %1279 = vmatpush.xpose.msra.mxu0 0.0
    %1280 = vmatpush.xpose.msra.mxu0 0.0
    %1281 = vmatpush.xpose.msra.mxu0 %v1271
    %1282 = vmatpush.xpose.msra.mxu0 %v1268
    %1283 = vmatpush.xpose.msra.mxu0 %v1265
    %1284 = vmatpush.xpose.msra.mxu0 %v1262
    %1285 = vmatpush.xpose.msra.mxu0 %v1259
    %1286 = vmatpush.xpose.msra.mxu0 %v1256
    %1287 = vmatpush.xpose.msra.mxu0 %v1253
    %1288 = vmatpush.xpose.msra.mxu0 %v1250
    %1289 = vmatmul.f32.gmra.mxu0 %v1226
    %v1290 = vpop.f32.mrf.mxu0
    %v1291 = vadd.f32 0.0, %v1290
    %1292 = vmatmul.f32.gmra.mxu0 %v1229
    %v1293 = vpop.f32.mrf.mxu0
    %v1294 = vadd.f32 0.0, %v1293
    %1295 = vmatmul.f32.gmra.mxu0 %v1232
    %v1296 = vpop.f32.mrf.mxu0
    %v1297 = vadd.f32 0.0, %v1296
    %1298 = vmatmul.f32.gmra.mxu0 %v1235
    %v1299 = vpop.f32.mrf.mxu0
    %v1300 = vadd.f32 0.0, %v1299
    %1301 = vmatmul.f32.gmra.mxu0 %v1238
    %v1302 = vpop.f32.mrf.mxu0
    %v1303 = vadd.f32 0.0, %v1302
    %1304 = vmatmul.f32.gmra.mxu0 %v1241
    %v1305 = vpop.f32.mrf.mxu0
    %v1306 = vadd.f32 0.0, %v1305
    %1307 = vmatmul.f32.gmra.mxu0 %v1244
    %v1308 = vpop.f32.mrf.mxu0
    %v1309 = vadd.f32 0.0, %v1308
    %1310 = vmatmul.f32.gmra.mxu0 %v1247
    %v1311 = vpop.f32.mrf.mxu0
    %v1312 = vadd.f32 0.0, %v1311
    %1313 = vdwg.mxu0
    %v1314 = vsel %vm60, %v1291, -inf
    %1315 = vmax.xlane.f32.xlu0 %v1314
    %v1316 = vpop.xlane.xlu0 %1315
    %v1317 = vsel %vm60, %v1294, -inf
    %1318 = vmax.xlane.f32.xlu0 %v1317
    %v1319 = vpop.xlane.xlu0 %1318
    %v1320 = vsel %vm60, %v1297, -inf
    %1321 = vmax.xlane.f32.xlu0 %v1320
    %v1322 = vpop.xlane.xlu0 %1321
    %v1323 = vsel %vm60, %v1300, -inf
    %1324 = vmax.xlane.f32.xlu0 %v1323
    %v1325 = vpop.xlane.xlu0 %1324
    %v1326 = vsel %vm60, %v1303, -inf
    %1327 = vmax.xlane.f32.xlu0 %v1326
    %v1328 = vpop.xlane.xlu0 %1327
    %v1329 = vsel %vm60, %v1306, -inf
    %1330 = vmax.xlane.f32.xlu0 %v1329
    %v1331 = vpop.xlane.xlu0 %1330
    %v1332 = vsel %vm60, %v1309, -inf
    %1333 = vmax.xlane.f32.xlu0 %v1332
    %v1334 = vpop.xlane.xlu0 %1333
    %v1335 = vsel %vm60, %v1312, -inf
    %1336 = vmax.xlane.f32.xlu0 %v1335
    %v1337 = vpop.xlane.xlu0 %1336
    %v1338 = vsub.f32 %v1291, %v1316
    %v1339 = vsub.f32 %v1294, %v1319
    %v1340 = vsub.f32 %v1297, %v1322
    %v1341 = vsub.f32 %v1300, %v1325
    %v1342 = vsub.f32 %v1303, %v1328
    %v1343 = vsub.f32 %v1306, %v1331
    %v1344 = vsub.f32 %v1309, %v1334
    %v1345 = vsub.f32 %v1312, %v1337
    %v1346 = vmul.f32 %v1338, 1.442695
    %v1347 = vpow.pop %v1346
    %v1348 = vmul.f32 %v1339, 1.442695
    %v1349 = vpow.pop %v1348
    %v1350 = vmul.f32 %v1340, 1.442695
    %v1351 = vpow.pop %v1350
    %v1352 = vmul.f32 %v1341, 1.442695
    %v1353 = vpow.pop %v1352
    %v1354 = vmul.f32 %v1342, 1.442695
    %v1355 = vpow.pop %v1354
    %v1356 = vmul.f32 %v1343, 1.442695
    %v1357 = vpow.pop %v1356
    %v1358 = vmul.f32 %v1344, 1.442695
    %v1359 = vpow.pop %v1358
    %v1360 = vmul.f32 %v1345, 1.442695
    %v1361 = vpow.pop %v1360
    %v1362 = vsel %vm60, %v1347, 0.0
    %1363 = vadd.xlane.f32.xlu0 %v1362
    %v1364 = vpop.xlane.xlu0 %1363
    %v1365 = vsel %vm60, %v1349, 0.0
    %1366 = vadd.xlane.f32.xlu0 %v1365
    %v1367 = vpop.xlane.xlu0 %1366
    %v1368 = vsel %vm60, %v1351, 0.0
    %1369 = vadd.xlane.f32.xlu0 %v1368
    %v1370 = vpop.xlane.xlu0 %1369
    %v1371 = vsel %vm60, %v1353, 0.0
    %1372 = vadd.xlane.f32.xlu0 %v1371
    %v1373 = vpop.xlane.xlu0 %1372
    %v1374 = vsel %vm60, %v1355, 0.0
    %1375 = vadd.xlane.f32.xlu0 %v1374
    %v1376 = vpop.xlane.xlu0 %1375
    %v1377 = vsel %vm60, %v1357, 0.0
    %1378 = vadd.xlane.f32.xlu0 %v1377
    %v1379 = vpop.xlane.xlu0 %1378
    %v1380 = vsel %vm60, %v1359, 0.0
    %1381 = vadd.xlane.f32.xlu0 %v1380
    %v1382 = vpop.xlane.xlu0 %1381
    %v1383 = vsel %vm60, %v1361, 0.0
    %1384 = vadd.xlane.f32.xlu0 %v1383
    %v1385 = vpop.xlane.xlu0 %1384
    %v1387 = vsel %vm60, %v1347, 0
    %v1390 = vsel %vm60, %v1349, 0
    %v1393 = vsel %vm60, %v1351, 0
    %v1396 = vsel %vm60, %v1353, 0
    %v1399 = vsel %vm60, %v1355, 0
    %v1402 = vsel %vm60, %v1357, 0
    %v1405 = vsel %vm60, %v1359, 0
    %v1408 = vsel %vm60, %v1361, 0
    %1410 = vmatpush.msra.mxu0 0.0
    %1411 = vmatpush.msra.mxu0 0.0
    %1412 = vmatpush.msra.mxu0 0.0
    %1413 = vmatpush.msra.mxu0 0.0
    %1414 = vmatpush.msra.mxu0 0.0
    %1415 = vmatpush.msra.mxu0 0.0
    %1416 = vmatpush.msra.mxu0 0.0
    %1417 = vmatpush.msra.mxu0 0.0
    %1418 = vmatpush.msra.mxu0 %v1224
    %1419 = vmatpush.msra.mxu0 %v1223
    %1420 = vmatpush.msra.mxu0 %v1222
    %1421 = vmatpush.msra.mxu0 %v1221
    %1422 = vmatpush.msra.mxu0 %v1220
    %1423 = vmatpush.msra.mxu0 %v1219
    %1424 = vmatpush.msra.mxu0 %v1218
    %1425 = vmatpush.msra.mxu0 %v1217
    %1426 = vmatmul.f32.gmra.mxu0 %v1387
    %v1427 = vpop.f32.mrf.mxu0
    %v1428 = vadd.f32 0.0, %v1427
    %1429 = vmatmul.f32.gmra.mxu0 %v1390
    %v1430 = vpop.f32.mrf.mxu0
    %v1431 = vadd.f32 0.0, %v1430
    %1432 = vmatmul.f32.gmra.mxu0 %v1393
    %v1433 = vpop.f32.mrf.mxu0
    %v1434 = vadd.f32 0.0, %v1433
    %1435 = vmatmul.f32.gmra.mxu0 %v1396
    %v1436 = vpop.f32.mrf.mxu0
    %v1437 = vadd.f32 0.0, %v1436
    %1438 = vmatmul.f32.gmra.mxu0 %v1399
    %v1439 = vpop.f32.mrf.mxu0
    %v1440 = vadd.f32 0.0, %v1439
    %1441 = vmatmul.f32.gmra.mxu0 %v1402
    %v1442 = vpop.f32.mrf.mxu0
    %v1443 = vadd.f32 0.0, %v1442
    %1444 = vmatmul.f32.gmra.mxu0 %v1405
    %v1445 = vpop.f32.mrf.mxu0
    %v1446 = vadd.f32 0.0, %v1445
    %1447 = vmatmul.f32.gmra.mxu0 %v1408
    %v1448 = vpop.f32.mrf.mxu0
    %v1449 = vadd.f32 0.0, %v1448
    %1450 = vdwg.mxu0
    %v1451 = vrcp.pop %v1364
    %v1452 = vmul.f32 %v1364, %v1451
    %v1453 = vsub.f32 1.0, %v1452
    %v1454 = vmul.f32 %v1451, %v1453
    %v1455 = vadd.f32 %v1451, %v1454
    %vm1456 = vweird.f32 %v1364
    %vm1457 = vweird.f32 %v1451
    %vm1458 = vmor %vm1456, %vm1457
    %v1459 = vsel %vm1458, %v1451, %v1455
    %v1460 = vand.u32 2147483647, %v1364
    %vm1461 = vcmp.eq.f32.partialorder %v1460, 8.507059e+37
    %v1462 = vand.u32 %v1364, 2147483648
    %v1463 = vor.u32 1.1754944e-38, %v1462
    %v1464 = vsel %vm1461, %v1463, %v1459
    %v1465 = vmul.f32 1.0, %v1464
    %v1466 = vrcp.pop %v1367
    %v1467 = vmul.f32 %v1367, %v1466
    %v1468 = vsub.f32 1.0, %v1467
    %v1469 = vmul.f32 %v1466, %v1468
    %v1470 = vadd.f32 %v1466, %v1469
    %vm1471 = vweird.f32 %v1367
    %vm1472 = vweird.f32 %v1466
    %vm1473 = vmor %vm1471, %vm1472
    %v1474 = vsel %vm1473, %v1466, %v1470
    %v1475 = vand.u32 2147483647, %v1367
    %vm1476 = vcmp.eq.f32.partialorder %v1475, 8.507059e+37
    %v1477 = vand.u32 %v1367, 2147483648
    %v1478 = vor.u32 1.1754944e-38, %v1477
    %v1479 = vsel %vm1476, %v1478, %v1474
    %v1480 = vmul.f32 1.0, %v1479
    %v1481 = vrcp.pop %v1370
    %v1482 = vmul.f32 %v1370, %v1481
    %v1483 = vsub.f32 1.0, %v1482
    %v1484 = vmul.f32 %v1481, %v1483
    %v1485 = vadd.f32 %v1481, %v1484
    %vm1486 = vweird.f32 %v1370
    %vm1487 = vweird.f32 %v1481
    %vm1488 = vmor %vm1486, %vm1487
    %v1489 = vsel %vm1488, %v1481, %v1485
    %v1490 = vand.u32 2147483647, %v1370
    %vm1491 = vcmp.eq.f32.partialorder %v1490, 8.507059e+37
    %v1492 = vand.u32 %v1370, 2147483648
    %v1493 = vor.u32 1.1754944e-38, %v1492
    %v1494 = vsel %vm1491, %v1493, %v1489
    %v1495 = vmul.f32 1.0, %v1494
    %v1496 = vrcp.pop %v1373
    %v1497 = vmul.f32 %v1373, %v1496
    %v1498 = vsub.f32 1.0, %v1497
    %v1499 = vmul.f32 %v1496, %v1498
    %v1500 = vadd.f32 %v1496, %v1499
    %vm1501 = vweird.f32 %v1373
    %vm1502 = vweird.f32 %v1496
    %vm1503 = vmor %vm1501, %vm1502
    %v1504 = vsel %vm1503, %v1496, %v1500
    %v1505 = vand.u32 2147483647, %v1373
    %vm1506 = vcmp.eq.f32.partialorder %v1505, 8.507059e+37
    %v1507 = vand.u32 %v1373, 2147483648
    %v1508 = vor.u32 1.1754944e-38, %v1507
    %v1509 = vsel %vm1506, %v1508, %v1504
    %v1510 = vmul.f32 1.0, %v1509
    %v1511 = vrcp.pop %v1376
    %v1512 = vmul.f32 %v1376, %v1511
    %v1513 = vsub.f32 1.0, %v1512
    %v1514 = vmul.f32 %v1511, %v1513
    %v1515 = vadd.f32 %v1511, %v1514
    %vm1516 = vweird.f32 %v1376
    %vm1517 = vweird.f32 %v1511
    %vm1518 = vmor %vm1516, %vm1517
    %v1519 = vsel %vm1518, %v1511, %v1515
    %v1520 = vand.u32 2147483647, %v1376
    %vm1521 = vcmp.eq.f32.partialorder %v1520, 8.507059e+37
    %v1522 = vand.u32 %v1376, 2147483648
    %v1523 = vor.u32 1.1754944e-38, %v1522
    %v1524 = vsel %vm1521, %v1523, %v1519
    %v1525 = vmul.f32 1.0, %v1524
    %v1526 = vrcp.pop %v1379
    %v1527 = vmul.f32 %v1379, %v1526
    %v1528 = vsub.f32 1.0, %v1527
    %v1529 = vmul.f32 %v1526, %v1528
    %v1530 = vadd.f32 %v1526, %v1529
    %vm1531 = vweird.f32 %v1379
    %vm1532 = vweird.f32 %v1526
    %vm1533 = vmor %vm1531, %vm1532
    %v1534 = vsel %vm1533, %v1526, %v1530
    %v1535 = vand.u32 2147483647, %v1379
    %vm1536 = vcmp.eq.f32.partialorder %v1535, 8.507059e+37
    %v1537 = vand.u32 %v1379, 2147483648
    %v1538 = vor.u32 1.1754944e-38, %v1537
    %v1539 = vsel %vm1536, %v1538, %v1534
    %v1540 = vmul.f32 1.0, %v1539
    %v1541 = vrcp.pop %v1382
    %v1542 = vmul.f32 %v1382, %v1541
    %v1543 = vsub.f32 1.0, %v1542
    %v1544 = vmul.f32 %v1541, %v1543
    %v1545 = vadd.f32 %v1541, %v1544
    %vm1546 = vweird.f32 %v1382
    %vm1547 = vweird.f32 %v1541
    %vm1548 = vmor %vm1546, %vm1547
    %v1549 = vsel %vm1548, %v1541, %v1545
    %v1550 = vand.u32 2147483647, %v1382
    %vm1551 = vcmp.eq.f32.partialorder %v1550, 8.507059e+37
    %v1552 = vand.u32 %v1382, 2147483648
    %v1553 = vor.u32 1.1754944e-38, %v1552
    %v1554 = vsel %vm1551, %v1553, %v1549
    %v1555 = vmul.f32 1.0, %v1554
    %v1556 = vrcp.pop %v1385
    %v1557 = vmul.f32 %v1385, %v1556
    %v1558 = vsub.f32 1.0, %v1557
    %v1559 = vmul.f32 %v1556, %v1558
    %v1560 = vadd.f32 %v1556, %v1559
    %vm1561 = vweird.f32 %v1385
    %vm1562 = vweird.f32 %v1556
    %vm1563 = vmor %vm1561, %vm1562
    %v1564 = vsel %vm1563, %v1556, %v1560
    %v1565 = vand.u32 2147483647, %v1385
    %vm1566 = vcmp.eq.f32.partialorder %v1565, 8.507059e+37
    %v1567 = vand.u32 %v1385, 2147483648
    %v1568 = vor.u32 1.1754944e-38, %v1567
    %v1569 = vsel %vm1566, %v1568, %v1564
    %v1570 = vmul.f32 1.0, %v1569
    %v1571 = vmul.f32 %v1428, %v1465
    %v1572 = vmul.f32 %v1431, %v1480
    %v1573 = vmul.f32 %v1434, %v1495
    %v1574 = vmul.f32 %v1437, %v1510
    %v1575 = vmul.f32 %v1440, %v1525
    %v1576 = vmul.f32 %v1443, %v1540
    %v1577 = vmul.f32 %v1446, %v1555
    %v1578 = vmul.f32 %v1449, %v1570
    %1587 = vrot.lane.b32.xlu0 %v1571, 64
    %v1588 = vpop.permute.xlu0 %1587
    %1589 = vrot.lane.b32.xlu0 %v1572, 64
    %v1590 = vpop.permute.xlu0 %1589
    %1591 = vrot.lane.b32.xlu0 %v1573, 64
    %v1592 = vpop.permute.xlu0 %1591
    %1593 = vrot.lane.b32.xlu0 %v1574, 64
    %v1594 = vpop.permute.xlu0 %1593
    %1595 = vrot.lane.b32.xlu0 %v1575, 64
    %v1596 = vpop.permute.xlu0 %1595
    %1597 = vrot.lane.b32.xlu0 %v1576, 64
    %v1598 = vpop.permute.xlu0 %1597
    %1599 = vrot.lane.b32.xlu0 %v1577, 64
    %v1600 = vpop.permute.xlu0 %1599
    %1601 = vrot.lane.b32.xlu0 %v1578, 64
    %v1602 = vpop.permute.xlu0 %1601
    %v1611 = vsel %vm60, %v1199, %v1588
    %v1612 = vsel %vm60, %v1200, %v1590
    %v1613 = vsel %vm60, %v1201, %v1592
    %v1614 = vsel %vm60, %v1202, %v1594
    %v1615 = vsel %vm60, %v1203, %v1596
    %v1616 = vsel %vm60, %v1204, %v1598
    %v1617 = vsel %vm60, %v1205, %v1600
    %v1618 = vsel %vm60, %v1206, %v1602
    %1619 = vst [vmem:[#allocation7 + $0x8] sm:$0xff] %v1611
    %1620 = vst [vmem:[#allocation7 + $0x20] sm:$0xff] %v1612
    %1621 = vst [vmem:[#allocation7 + $0x38] sm:$0xff] %v1613
    %1622 = vst [vmem:[#allocation7 + $0x50] sm:$0xff] %v1614
    %1623 = vst [vmem:[#allocation7 + $0x68] sm:$0xff] %v1615
    %1624 = vst [vmem:[#allocation7 + $0x80] sm:$0xff] %v1616
    %1625 = vst [vmem:[#allocation7 + $0x98] sm:$0xff] %v1617
    %1626 = vst [vmem:[#allocation7 + $0xb0] sm:$0xff] %v1618
    %s1627 = scalar_lea.vmem [#allocation2], 256
    %v1628 = vld [vmem:[%s1627] sm:$0xff]
    %v1629 = vld [vmem:[%s1627 + $0x8] sm:$0xff]
    %v1630 = vld [vmem:[%s1627 + $0x10] sm:$0xff]
    %v1631 = vld [vmem:[%s1627 + $0x18] sm:$0xff]
    %v1632 = vld [vmem:[%s1627 + $0x20] sm:$0xff]
    %v1633 = vld [vmem:[%s1627 + $0x28] sm:$0xff]
    %v1634 = vld [vmem:[%s1627 + $0x30] sm:$0xff]
    %v1635 = vld [vmem:[%s1627 + $0x38] sm:$0xff]
    %s1636 = scalar_lea.vmem [#allocation5], 256
    %v1637 = vld [vmem:[%s1636] sm:$0xff]
    %v1638 = vld [vmem:[%s1636 + $0x8] sm:$0xff]
    %v1639 = vld [vmem:[%s1636 + $0x10] sm:$0xff]
    %v1640 = vld [vmem:[%s1636 + $0x18] sm:$0xff]
    %v1641 = vld [vmem:[%s1636 + $0x20] sm:$0xff]
    %v1642 = vld [vmem:[%s1636 + $0x28] sm:$0xff]
    %v1643 = vld [vmem:[%s1636 + $0x30] sm:$0xff]
    %v1644 = vld [vmem:[%s1636 + $0x38] sm:$0xff]
    %v1646 = vsel %vm60, %v1628, 0
    %v1649 = vsel %vm60, %v1629, 0
    %v1652 = vsel %vm60, %v1630, 0
    %v1655 = vsel %vm60, %v1631, 0
    %v1658 = vsel %vm60, %v1632, 0
    %v1661 = vsel %vm60, %v1633, 0
    %v1664 = vsel %vm60, %v1634, 0
    %v1667 = vsel %vm60, %v1635, 0
    %v1670 = vsel %vm60, %v1637, 0
    %v1673 = vsel %vm60, %v1638, 0
    %v1676 = vsel %vm60, %v1639, 0
    %v1679 = vsel %vm60, %v1640, 0
    %v1682 = vsel %vm60, %v1641, 0
    %v1685 = vsel %vm60, %v1642, 0
    %v1688 = vsel %vm60, %v1643, 0
    %v1691 = vsel %vm60, %v1644, 0
    %1693 = vmatpush.xpose.msra.mxu0 0.0
    %1694 = vmatpush.xpose.msra.mxu0 0.0
    %1695 = vmatpush.xpose.msra.mxu0 0.0
    %1696 = vmatpush.xpose.msra.mxu0 0.0
    %1697 = vmatpush.xpose.msra.mxu0 0.0
    %1698 = vmatpush.xpose.msra.mxu0 0.0
    %1699 = vmatpush.xpose.msra.mxu0 0.0
    %1700 = vmatpush.xpose.msra.mxu0 0.0
    %1701 = vmatpush.xpose.msra.mxu0 %v1691
    %1702 = vmatpush.xpose.msra.mxu0 %v1688
    %1703 = vmatpush.xpose.msra.mxu0 %v1685
    %1704 = vmatpush.xpose.msra.mxu0 %v1682
    %1705 = vmatpush.xpose.msra.mxu0 %v1679
    %1706 = vmatpush.xpose.msra.mxu0 %v1676
    %1707 = vmatpush.xpose.msra.mxu0 %v1673
    %1708 = vmatpush.xpose.msra.mxu0 %v1670
    %1709 = vmatmul.f32.gmra.mxu0 %v1646
    %v1710 = vpop.f32.mrf.mxu0
    %v1711 = vadd.f32 0.0, %v1710
    %1712 = vmatmul.f32.gmra.mxu0 %v1649
    %v1713 = vpop.f32.mrf.mxu0
    %v1714 = vadd.f32 0.0, %v1713
    %1715 = vmatmul.f32.gmra.mxu0 %v1652
    %v1716 = vpop.f32.mrf.mxu0
    %v1717 = vadd.f32 0.0, %v1716
    %1718 = vmatmul.f32.gmra.mxu0 %v1655
    %v1719 = vpop.f32.mrf.mxu0
    %v1720 = vadd.f32 0.0, %v1719
    %1721 = vmatmul.f32.gmra.mxu0 %v1658
    %v1722 = vpop.f32.mrf.mxu0
    %v1723 = vadd.f32 0.0, %v1722
    %1724 = vmatmul.f32.gmra.mxu0 %v1661
    %v1725 = vpop.f32.mrf.mxu0
    %v1726 = vadd.f32 0.0, %v1725
    %1727 = vmatmul.f32.gmra.mxu0 %v1664
    %v1728 = vpop.f32.mrf.mxu0
    %v1729 = vadd.f32 0.0, %v1728
    %1730 = vmatmul.f32.gmra.mxu0 %v1667
    %v1731 = vpop.f32.mrf.mxu0
    %v1732 = vadd.f32 0.0, %v1731
    %1733 = vdwg.mxu0
    %v1734 = vsel %vm60, %v1711, -inf
    %1735 = vmax.xlane.f32.xlu0 %v1734
    %v1736 = vpop.xlane.xlu0 %1735
    %v1737 = vsel %vm60, %v1714, -inf
    %1738 = vmax.xlane.f32.xlu0 %v1737
    %v1739 = vpop.xlane.xlu0 %1738
    %v1740 = vsel %vm60, %v1717, -inf
    %1741 = vmax.xlane.f32.xlu0 %v1740
    %v1742 = vpop.xlane.xlu0 %1741
    %v1743 = vsel %vm60, %v1720, -inf
    %1744 = vmax.xlane.f32.xlu0 %v1743
    %v1745 = vpop.xlane.xlu0 %1744
    %v1746 = vsel %vm60, %v1723, -inf
    %1747 = vmax.xlane.f32.xlu0 %v1746
    %v1748 = vpop.xlane.xlu0 %1747
    %v1749 = vsel %vm60, %v1726, -inf
    %1750 = vmax.xlane.f32.xlu0 %v1749
    %v1751 = vpop.xlane.xlu0 %1750
    %v1752 = vsel %vm60, %v1729, -inf
    %1753 = vmax.xlane.f32.xlu0 %v1752
    %v1754 = vpop.xlane.xlu0 %1753
    %v1755 = vsel %vm60, %v1732, -inf
    %1756 = vmax.xlane.f32.xlu0 %v1755
    %v1757 = vpop.xlane.xlu0 %1756
    %v1758 = vsub.f32 %v1711, %v1736
    %v1759 = vsub.f32 %v1714, %v1739
    %v1760 = vsub.f32 %v1717, %v1742
    %v1761 = vsub.f32 %v1720, %v1745
    %v1762 = vsub.f32 %v1723, %v1748
    %v1763 = vsub.f32 %v1726, %v1751
    %v1764 = vsub.f32 %v1729, %v1754
    %v1765 = vsub.f32 %v1732, %v1757
    %v1766 = vmul.f32 %v1758, 1.442695
    %v1767 = vpow.pop %v1766
    %v1768 = vmul.f32 %v1759, 1.442695
    %v1769 = vpow.pop %v1768
    %v1770 = vmul.f32 %v1760, 1.442695
    %v1771 = vpow.pop %v1770
    %v1772 = vmul.f32 %v1761, 1.442695
    %v1773 = vpow.pop %v1772
    %v1774 = vmul.f32 %v1762, 1.442695
    %v1775 = vpow.pop %v1774
    %v1776 = vmul.f32 %v1763, 1.442695
    %v1777 = vpow.pop %v1776
    %v1778 = vmul.f32 %v1764, 1.442695
    %v1779 = vpow.pop %v1778
    %v1780 = vmul.f32 %v1765, 1.442695
    %v1781 = vpow.pop %v1780
    %v1782 = vsel %vm60, %v1767, 0.0
    %1783 = vadd.xlane.f32.xlu0 %v1782
    %v1784 = vpop.xlane.xlu0 %1783
    %v1785 = vsel %vm60, %v1769, 0.0
    %1786 = vadd.xlane.f32.xlu0 %v1785
    %v1787 = vpop.xlane.xlu0 %1786
    %v1788 = vsel %vm60, %v1771, 0.0
    %1789 = vadd.xlane.f32.xlu0 %v1788
    %v1790 = vpop.xlane.xlu0 %1789
    %v1791 = vsel %vm60, %v1773, 0.0
    %1792 = vadd.xlane.f32.xlu0 %v1791
    %v1793 = vpop.xlane.xlu0 %1792
    %v1794 = vsel %vm60, %v1775, 0.0
    %1795 = vadd.xlane.f32.xlu0 %v1794
    %v1796 = vpop.xlane.xlu0 %1795
    %v1797 = vsel %vm60, %v1777, 0.0
    %1798 = vadd.xlane.f32.xlu0 %v1797
    %v1799 = vpop.xlane.xlu0 %1798
    %v1800 = vsel %vm60, %v1779, 0.0
    %1801 = vadd.xlane.f32.xlu0 %v1800
    %v1802 = vpop.xlane.xlu0 %1801
    %v1803 = vsel %vm60, %v1781, 0.0
    %1804 = vadd.xlane.f32.xlu0 %v1803
    %v1805 = vpop.xlane.xlu0 %1804
    %v1807 = vsel %vm60, %v1767, 0
    %v1810 = vsel %vm60, %v1769, 0
    %v1813 = vsel %vm60, %v1771, 0
    %v1816 = vsel %vm60, %v1773, 0
    %v1819 = vsel %vm60, %v1775, 0
    %v1822 = vsel %vm60, %v1777, 0
    %v1825 = vsel %vm60, %v1779, 0
    %v1828 = vsel %vm60, %v1781, 0
    %1830 = vmatpush.msra.mxu0 0.0
    %1831 = vmatpush.msra.mxu0 0.0
    %1832 = vmatpush.msra.mxu0 0.0
    %1833 = vmatpush.msra.mxu0 0.0
    %1834 = vmatpush.msra.mxu0 0.0
    %1835 = vmatpush.msra.mxu0 0.0
    %1836 = vmatpush.msra.mxu0 0.0
    %1837 = vmatpush.msra.mxu0 0.0
    %1838 = vmatpush.msra.mxu0 %v1644
    %1839 = vmatpush.msra.mxu0 %v1643
    %1840 = vmatpush.msra.mxu0 %v1642
    %1841 = vmatpush.msra.mxu0 %v1641
    %1842 = vmatpush.msra.mxu0 %v1640
    %1843 = vmatpush.msra.mxu0 %v1639
    %1844 = vmatpush.msra.mxu0 %v1638
    %1845 = vmatpush.msra.mxu0 %v1637
    %1846 = vmatmul.f32.gmra.mxu0 %v1807
    %v1847 = vpop.f32.mrf.mxu0
    %v1848 = vadd.f32 0.0, %v1847
    %1849 = vmatmul.f32.gmra.mxu0 %v1810
    %v1850 = vpop.f32.mrf.mxu0
    %v1851 = vadd.f32 0.0, %v1850
    %1852 = vmatmul.f32.gmra.mxu0 %v1813
    %v1853 = vpop.f32.mrf.mxu0
    %v1854 = vadd.f32 0.0, %v1853
    %1855 = vmatmul.f32.gmra.mxu0 %v1816
    %v1856 = vpop.f32.mrf.mxu0
    %v1857 = vadd.f32 0.0, %v1856
    %1858 = vmatmul.f32.gmra.mxu0 %v1819
    %v1859 = vpop.f32.mrf.mxu0
    %v1860 = vadd.f32 0.0, %v1859
    %1861 = vmatmul.f32.gmra.mxu0 %v1822
    %v1862 = vpop.f32.mrf.mxu0
    %v1863 = vadd.f32 0.0, %v1862
    %1864 = vmatmul.f32.gmra.mxu0 %v1825
    %v1865 = vpop.f32.mrf.mxu0
    %v1866 = vadd.f32 0.0, %v1865
    %1867 = vmatmul.f32.gmra.mxu0 %v1828
    %v1868 = vpop.f32.mrf.mxu0
    %v1869 = vadd.f32 0.0, %v1868
    %1870 = vdwg.mxu0
    %v1871 = vrcp.pop %v1784
    %v1872 = vmul.f32 %v1784, %v1871
    %v1873 = vsub.f32 1.0, %v1872
    %v1874 = vmul.f32 %v1871, %v1873
    %v1875 = vadd.f32 %v1871, %v1874
    %vm1876 = vweird.f32 %v1784
    %vm1877 = vweird.f32 %v1871
    %vm1878 = vmor %vm1876, %vm1877
    %v1879 = vsel %vm1878, %v1871, %v1875
    %v1880 = vand.u32 2147483647, %v1784
    %vm1881 = vcmp.eq.f32.partialorder %v1880, 8.507059e+37
    %v1882 = vand.u32 %v1784, 2147483648
    %v1883 = vor.u32 1.1754944e-38, %v1882
    %v1884 = vsel %vm1881, %v1883, %v1879
    %v1885 = vmul.f32 1.0, %v1884
    %v1886 = vrcp.pop %v1787
    %v1887 = vmul.f32 %v1787, %v1886
    %v1888 = vsub.f32 1.0, %v1887
    %v1889 = vmul.f32 %v1886, %v1888
    %v1890 = vadd.f32 %v1886, %v1889
    %vm1891 = vweird.f32 %v1787
    %vm1892 = vweird.f32 %v1886
    %vm1893 = vmor %vm1891, %vm1892
    %v1894 = vsel %vm1893, %v1886, %v1890
    %v1895 = vand.u32 2147483647, %v1787
    %vm1896 = vcmp.eq.f32.partialorder %v1895, 8.507059e+37
    %v1897 = vand.u32 %v1787, 2147483648
    %v1898 = vor.u32 1.1754944e-38, %v1897
    %v1899 = vsel %vm1896, %v1898, %v1894
    %v1900 = vmul.f32 1.0, %v1899
    %v1901 = vrcp.pop %v1790
    %v1902 = vmul.f32 %v1790, %v1901
    %v1903 = vsub.f32 1.0, %v1902
    %v1904 = vmul.f32 %v1901, %v1903
    %v1905 = vadd.f32 %v1901, %v1904
    %vm1906 = vweird.f32 %v1790
    %vm1907 = vweird.f32 %v1901
    %vm1908 = vmor %vm1906, %vm1907
    %v1909 = vsel %vm1908, %v1901, %v1905
    %v1910 = vand.u32 2147483647, %v1790
    %vm1911 = vcmp.eq.f32.partialorder %v1910, 8.507059e+37
    %v1912 = vand.u32 %v1790, 2147483648
    %v1913 = vor.u32 1.1754944e-38, %v1912
    %v1914 = vsel %vm1911, %v1913, %v1909
    %v1915 = vmul.f32 1.0, %v1914
    %v1916 = vrcp.pop %v1793
    %v1917 = vmul.f32 %v1793, %v1916
    %v1918 = vsub.f32 1.0, %v1917
    %v1919 = vmul.f32 %v1916, %v1918
    %v1920 = vadd.f32 %v1916, %v1919
    %vm1921 = vweird.f32 %v1793
    %vm1922 = vweird.f32 %v1916
    %vm1923 = vmor %vm1921, %vm1922
    %v1924 = vsel %vm1923, %v1916, %v1920
    %v1925 = vand.u32 2147483647, %v1793
    %vm1926 = vcmp.eq.f32.partialorder %v1925, 8.507059e+37
    %v1927 = vand.u32 %v1793, 2147483648
    %v1928 = vor.u32 1.1754944e-38, %v1927
    %v1929 = vsel %vm1926, %v1928, %v1924
    %v1930 = vmul.f32 1.0, %v1929
    %v1931 = vrcp.pop %v1796
    %v1932 = vmul.f32 %v1796, %v1931
    %v1933 = vsub.f32 1.0, %v1932
    %v1934 = vmul.f32 %v1931, %v1933
    %v1935 = vadd.f32 %v1931, %v1934
    %vm1936 = vweird.f32 %v1796
    %vm1937 = vweird.f32 %v1931
    %vm1938 = vmor %vm1936, %vm1937
    %v1939 = vsel %vm1938, %v1931, %v1935
    %v1940 = vand.u32 2147483647, %v1796
    %vm1941 = vcmp.eq.f32.partialorder %v1940, 8.507059e+37
    %v1942 = vand.u32 %v1796, 2147483648
    %v1943 = vor.u32 1.1754944e-38, %v1942
    %v1944 = vsel %vm1941, %v1943, %v1939
    %v1945 = vmul.f32 1.0, %v1944
    %v1946 = vrcp.pop %v1799
    %v1947 = vmul.f32 %v1799, %v1946
    %v1948 = vsub.f32 1.0, %v1947
    %v1949 = vmul.f32 %v1946, %v1948
    %v1950 = vadd.f32 %v1946, %v1949
    %vm1951 = vweird.f32 %v1799
    %vm1952 = vweird.f32 %v1946
    %vm1953 = vmor %vm1951, %vm1952
    %v1954 = vsel %vm1953, %v1946, %v1950
    %v1955 = vand.u32 2147483647, %v1799
    %vm1956 = vcmp.eq.f32.partialorder %v1955, 8.507059e+37
    %v1957 = vand.u32 %v1799, 2147483648
    %v1958 = vor.u32 1.1754944e-38, %v1957
    %v1959 = vsel %vm1956, %v1958, %v1954
    %v1960 = vmul.f32 1.0, %v1959
    %v1961 = vrcp.pop %v1802
    %v1962 = vmul.f32 %v1802, %v1961
    %v1963 = vsub.f32 1.0, %v1962
    %v1964 = vmul.f32 %v1961, %v1963
    %v1965 = vadd.f32 %v1961, %v1964
    %vm1966 = vweird.f32 %v1802
    %vm1967 = vweird.f32 %v1961
    %vm1968 = vmor %vm1966, %vm1967
    %v1969 = vsel %vm1968, %v1961, %v1965
    %v1970 = vand.u32 2147483647, %v1802
    %vm1971 = vcmp.eq.f32.partialorder %v1970, 8.507059e+37
    %v1972 = vand.u32 %v1802, 2147483648
    %v1973 = vor.u32 1.1754944e-38, %v1972
    %v1974 = vsel %vm1971, %v1973, %v1969
    %v1975 = vmul.f32 1.0, %v1974
    %v1976 = vrcp.pop %v1805
    %v1977 = vmul.f32 %v1805, %v1976
    %v1978 = vsub.f32 1.0, %v1977
    %v1979 = vmul.f32 %v1976, %v1978
    %v1980 = vadd.f32 %v1976, %v1979
    %vm1981 = vweird.f32 %v1805
    %vm1982 = vweird.f32 %v1976
    %vm1983 = vmor %vm1981, %vm1982
    %v1984 = vsel %vm1983, %v1976, %v1980
    %v1985 = vand.u32 2147483647, %v1805
    %vm1986 = vcmp.eq.f32.partialorder %v1985, 8.507059e+37
    %v1987 = vand.u32 %v1805, 2147483648
    %v1988 = vor.u32 1.1754944e-38, %v1987
    %v1989 = vsel %vm1986, %v1988, %v1984
    %v1990 = vmul.f32 1.0, %v1989
    %v1991 = vmul.f32 %v1848, %v1885
    %v1992 = vmul.f32 %v1851, %v1900
    %v1993 = vmul.f32 %v1854, %v1915
    %v1994 = vmul.f32 %v1857, %v1930
    %v1995 = vmul.f32 %v1860, %v1945
    %v1996 = vmul.f32 %v1863, %v1960
    %v1997 = vmul.f32 %v1866, %v1975
    %v1998 = vmul.f32 %v1869, %v1990
    %1999 = vst.msk [vmem:[#allocation7 + $0x10] sm:$0xff] %vm60, %v1991
    %2000 = vst.msk [vmem:[#allocation7 + $0x28] sm:$0xff] %vm60, %v1992
    %2001 = vst.msk [vmem:[#allocation7 + $0x40] sm:$0xff] %vm60, %v1993
    %2002 = vst.msk [vmem:[#allocation7 + $0x58] sm:$0xff] %vm60, %v1994
    %2003 = vst.msk [vmem:[#allocation7 + $0x70] sm:$0xff] %vm60, %v1995
    %2004 = vst.msk [vmem:[#allocation7 + $0x88] sm:$0xff] %vm60, %v1996
    %2005 = vst.msk [vmem:[#allocation7 + $0xa0] sm:$0xff] %vm60, %v1997
    %2006 = vst.msk [vmem:[#allocation7 + $0xb8] sm:$0xff] %vm60, %v1998
    // Predicated region
    $region18: #{tpu_custom_call.1} parent=1 // pred_check
      _
    $region19: #{tpu_custom_call.1} parent=1 // pred_check_branch
      %2008 = sbr.rel (0) target = $region21
    $region20: #{tpu_custom_call.1} parent=1 // pred_region
      %2010 = vsyncadd [#allocation4], 0
      %s2011 = sshll.u32 [#allocation7], 4
      %s2012 = int_to_ptr.vmem [resolvable:$true] %s2011
      %s2013 = sshll.u32 %s2, 4
      %s2014 = int_to_ptr.hbm [resolvable:$true] %s2013
      %2019 = dma.vmem_to_hbm [thread:$0]  %s2012, 3072, %s2014, [#allocation4], 384, 384, 24
    $region21: #{tpu_custom_call.1} parent=1 // pred_fallthru
      _
    // Predicated region
    $region22: #{tpu_custom_call.1} parent=1 // pred_check
      _
    $region23: #{tpu_custom_call.1} parent=1 // pred_check_branch
      %2021 = sbr.rel (0) target = $region25
    $region24: #{tpu_custom_call.1} parent=1 // pred_region
      %2023 = dma.done [#allocation4], 3072
    $region25: #{tpu_custom_call.1} parent=1 // pred_fallthru
      _
    %2024 = vsyncpa [#allocation3], 1
    %2025 = vsyncpa [#allocation6], 1
    %2026 = vsyncpa [#allocation4], 1

</llo_original>
